<compile_context>
chip_gen: v5e
topology: v5e:2x2
jax: 0.10.0
libtpu: 0.0.40
codegen_flags: <defaults>
</compile_context>

<pallas_src>
import math

import jax
import jax.numpy as jnp
from jax.experimental import pallas as pl
from jax.experimental.pallas import tpu as pltpu

LN_EPS = 1e-5  # PyTorch nn.LayerNorm default


# ---------------------------------------------------------------------------
# In-kernel math helpers (traced inside the Pallas kernel body)
# ---------------------------------------------------------------------------
def _gelu_tanh(x):
    # tanh-form GELU: one EUP tanh + a handful of VALU ops; ~3e-4 max abs deviation
    # from the exact erf GELU (nn.GELU() default), well inside the check tolerance.
    c = math.sqrt(2.0 / math.pi)
    return 0.5 * x * (1.0 + jnp.tanh(c * (x + 0.044715 * (x * x * x))))


def _layernorm_cols(h, gamma_col, beta_col, subtract_mean):
    # h: (d, bb) -- features on sublanes, batch on lanes.  Reductions over axis 0 are
    # cheap cross-vreg VALU adds + a short sublane reduce; the (1, bb) stats broadcast
    # back over sublanes (the cheap broadcast direction).
    d = h.shape[0]
    inv_d = 1.0 / d
    if subtract_mean:
        mu = jnp.sum(h, axis=0, keepdims=True) * inv_d
        h = h - mu
    # Params were pre-centered when subtract_mean is False, so the feature mean is
    # exactly zero and var = E[h^2] with no cancellation risk.
    var = jnp.sum(h * h, axis=0, keepdims=True) * inv_d
    inv = jax.lax.rsqrt(var + LN_EPS)
    return h * inv * gamma_col + beta_col


# ---------------------------------------------------------------------------
# Pallas kernel: whole encoder stack fused over one (features, batch-tile) slab
# ---------------------------------------------------------------------------
def _make_encoder_kernel(n_layers, use_residual, subtract_mean):
    def kernel(*refs):
        xT_ref = refs[0]
        oT_ref = refs[-1]
        layer_refs = refs[1:-1]  # (w0, p0, w1, p1, ...); w = (d_out, d_in), p = (d_out, 3)

        xT = xT_ref[...]  # (d_in0, bb), f32 (kept f32 so the residual is exact)
        h = xT
        for l in range(n_layers):
            w_ref = layer_refs[2 * l]
            p_ref = layer_refs[2 * l + 1]
            act = h if h.dtype == w_ref.dtype else h.astype(w_ref.dtype)
            # Transposed matmul: (d_out, d_in) @ (d_in, bb) -> (d_out, bb); f32 accum on MXU.
            h = jnp.dot(w_ref[...], act, preferred_element_type=jnp.float32)
            h = h + p_ref[:, 0:1]  # bias (per-feature column, broadcast across lanes)
            h = _layernorm_cols(h, p_ref[:, 1:2], p_ref[:, 2:3], subtract_mean)
            if l != n_layers - 1:  # encoder = layers[:-2]: last block keeps only Linear+LN
                h = _gelu_tanh(h)

        if use_residual:  # dims[0] == dims[-1]
            h = h + xT
        oT_ref[...] = h.astype(oT_ref.dtype)

    return kernel


# ---------------------------------------------------------------------------
# Tiling heuristics
# ---------------------------------------------------------------------------
def _tensorcores_per_chip():
    dev = jax.devices()[0]
    n = getattr(dev, "num_cores", None)
    if isinstance(n, int) and n >= 1:
        return n
    kind = str(getattr(dev, "device_kind", "")).lower()
    return 2 if ("v4" in kind or "v7" in kind or "7x" in kind) else 1


def _pick_block_b(B, n_cores):
    """Lane-aligned batch tile (block_b sits on the 128-wide lane axis).

    Candidates are multiples of 128, capped at 512: the unrolled layer stack keeps x,
    h and GELU temporaries live, so bigger tiles only add vreg<->VMEM spill traffic
    (VMEM *capacity* is never the limit here, even at v7x's 64 MiB).  On 2-TensorCore
    chips require >= 4 grid steps (>= 2 per core) so each core double-buffers its
    x/out DMAs against compute; on single-TC v5e/v6e prefer the fewest steps -- a
    forced split buys no parallelism, only per-step overhead, for small batches.
    """
    min_steps = 4 if n_cores >= 2 else 1
    for cand in (512, 256, 128):
        if B % cand == 0 and B // cand >= min_steps:
            return cand
    return B  # single full-extent block: always layout-legal, one grid step


def _const_spec(shape, buffered):
    """Full-extent BlockSpec for a grid-constant ref; single-buffered when supported."""
    if buffered and hasattr(pl, "Buffered"):
        try:
            return pl.BlockSpec(shape, lambda i: (0, 0), pipeline_mode=pl.Buffered(1))
        except TypeError:  # older BlockSpec signature without pipeline_mode
            pass
    return pl.BlockSpec(shape, lambda i: (0, 0))


# ---------------------------------------------------------------------------
# Wrapper
# ---------------------------------------------------------------------------
def protein_encoder_forward(x, params, *, block_b=None, bf16_matmul=False):
    """Fused ProteinEncoder forward.

    x: (B, protein_dim) float32.
    params: flat list [W (d_out, d_in), b (d_out,), gamma (d_out,), beta (d_out,)] per
            Linear+LayerNorm block, in PyTorch parameter layout.
    Returns (B, latent_dim).  Dropout is identity (inference semantics).
    """
    B, D = x.shape
    n_layers = len(params) // 4
    latent_dim = params[4 * (n_layers - 1)].shape[0]
    use_residual = (D == latent_dim)  # mirrors the module: dims[0] == dims[-1]

    if block_b is None:
        block_b = _pick_block_b(B, _tensorcores_per_chip())
    assert B % block_b == 0, "batch must be divisible by the batch tile"

    # Mean subtraction can only be skipped when the exact f32 pre-centering survives
    # into the matmul; bf16-rounded weights are only approximately centered.
    subtract_mean = bool(bf16_matmul)

    # Layout plumbing: batch on the lane axis inside the kernel.
    xT = x.T  # (D, B), f32

    const_args = []
    for l in range(n_layers):
        w, b, g, be = params[4 * l: 4 * l + 4]
        w = w.astype(jnp.float32)
        b = jnp.reshape(b, (-1,)).astype(jnp.float32)
        # Pre-center: post-matmul feature mean becomes exactly zero; LayerNorm output
        # is invariant to this per-sample constant shift.
        w = w - jnp.mean(w, axis=0, keepdims=True)
        b = b - jnp.mean(b)
        if bf16_matmul:
            w = w.astype(jnp.bfloat16)
        p = jnp.stack(
            [b, jnp.reshape(g, (-1,)).astype(jnp.float32),
             jnp.reshape(be, (-1,)).astype(jnp.float32)], axis=1)  # (d_out, 3)
        const_args += [w, p]

    def _run(buffered):
        in_specs = [pl.BlockSpec((D, block_b), lambda i: (0, i))]
        in_specs += [_const_spec(a.shape, buffered) for a in const_args]
        return pl.pallas_call(
            _make_encoder_kernel(n_layers, use_residual, subtract_mean),
            out_shape=jax.ShapeDtypeStruct((latent_dim, B), x.dtype),
            grid=(B // block_b,),
            in_specs=in_specs,
            out_specs=pl.BlockSpec((latent_dim, block_b), lambda i: (0, i)),
            compiler_params=pltpu.CompilerParams(dimension_semantics=("parallel",)),
        )(xT, *const_args)

    try:
        outT = _run(buffered=True)
    except Exception:
        # pipeline_mode=pl.Buffered(1) not accepted by this JAX/Mosaic build; retry
        # with plain (default double-buffered) specs -- identical numerics.
        outT = _run(buffered=False)
    return outT.T  # back to (B, latent_dim)


# ---------------------------------------------------------------------------
# Deterministic parameter init (mirrors nn.Linear / nn.LayerNorm defaults & layout)
# ---------------------------------------------------------------------------
def init_params(key, dims):
    params = []
    for i in range(len(dims) - 1):
        d_in, d_out = dims[i], dims[i + 1]
        key, kw, kb = jax.random.split(key, 3)
        bound = 1.0 / math.sqrt(d_in)
        w = jax.random.uniform(kw, (d_out, d_in), jnp.float32, -bound, bound)
        b = jax.random.uniform(kb, (d_out,), jnp.float32, -bound, bound)
        gamma = jnp.ones((d_out,), jnp.float32)
        beta = jnp.zeros((d_out,), jnp.float32)
        params.extend([w, b, gamma, beta])
    return params


# ---------------------------------------------------------------------------
# Plain-JAX reference (PyTorch semantics, exact erf GELU, uncentered params)
# ---------------------------------------------------------------------------
def reference_forward(x, params):
    h = x
    n_blocks = len(params) // 4
    for i in range(n_blocks):
        w, b, g, be = params[4 * i: 4 * i + 4]
        h = h @ w.T + b
        mu = jnp.mean(h, axis=-1, keepdims=True)
        var = jnp.mean((h - mu) ** 2, axis=-1, keepdims=True)
        h = (h - mu) * jax.lax.rsqrt(var + LN_EPS) * g + be
        if i != n_blocks - 1:  # layers[:-2] removes the final GELU
            h = jax.nn.gelu(h, approximate=False)
    if x.shape[-1] == h.shape[-1]:  # use_residual
        h = h + x
    return h


if __name__ == "__main__":
    # config: protein_dim=32, hidden_dims=[64, 48], latent_dim=32, use_layernorm=True
    # TODO(synk): nn.Dropout is identity here (inference); training-mode dropout would
    # need pltpu.prng_seed/prng_random_bits inside the kernel.
    dims = [32, 64, 48, 32]
    B = 16

    key = jax.random.PRNGKey(0)
    key, kx = jax.random.split(key)
    x = jax.random.normal(kx, (B, dims[0]), jnp.float32)
    params = init_params(key, dims)

    out = protein_encoder_forward(x, params)
    out = jax.block_until_ready(out)

    ref = reference_forward(x, params)
    assert out.shape == (B, dims[-1])
    # tanh-GELU vs exact erf-GELU contributes ~3e-4 per element; 3e-3 covers the stack.
    assert jnp.allclose(out, ref, atol=3e-3, rtol=3e-3), "mismatch vs JAX reference"

    print("KERNEL_OK")
</pallas_src>

<mosaic_0001>
module attributes {stable_mosaic.version = 11 : i64} {
  func.func @kernel(%arg0: i32, %arg1: memref<32x16xf32, #tpu.memory_space<vmem>>, %arg2: memref<64x32xf32, #tpu.memory_space<vmem>>, %arg3: memref<64x3xf32, #tpu.memory_space<vmem>>, %arg4: memref<48x64xf32, #tpu.memory_space<vmem>>, %arg5: memref<48x3xf32, #tpu.memory_space<vmem>>, %arg6: memref<32x48xf32, #tpu.memory_space<vmem>>, %arg7: memref<32x3xf32, #tpu.memory_space<vmem>>, %arg8: memref<32x16xf32, #tpu.memory_space<vmem>>) attributes {dimension_semantics = [#tpu.dimension_semantics<parallel>], iteration_bounds = array<i64: 1>, scalar_prefetch = 0 : i64, scratch_operands = 0 : i64, tpu.core_type = #tpu.core_type<tc>, window_params = [{transform_indices = @transform_0, window_bounds = array<i64: 32, 16>}, {pipeline_mode = #tpu.pipeline_mode<synchronous>, transform_indices = @transform_1, window_bounds = array<i64: 64, 32>}, {pipeline_mode = #tpu.pipeline_mode<synchronous>, transform_indices = @transform_2, window_bounds = array<i64: 64, 3>}, {pipeline_mode = #tpu.pipeline_mode<synchronous>, transform_indices = @transform_3, window_bounds = array<i64: 48, 64>}, {pipeline_mode = #tpu.pipeline_mode<synchronous>, transform_indices = @transform_4, window_bounds = array<i64: 48, 3>}, {pipeline_mode = #tpu.pipeline_mode<synchronous>, transform_indices = @transform_5, window_bounds = array<i64: 32, 48>}, {pipeline_mode = #tpu.pipeline_mode<synchronous>, transform_indices = @transform_6, window_bounds = array<i64: 32, 3>}, {transform_indices = @transform_7, window_bounds = array<i64: 32, 16>}]} {
    %c0 = arith.constant 0 : index
    %c0_0 = arith.constant 0 : index
    %0 = vector.load %arg1[%c0, %c0_0] : memref<32x16xf32, #tpu.memory_space<vmem>>, vector<32x16xf32>
    %c0_1 = arith.constant 0 : index
    %c0_2 = arith.constant 0 : index
    %1 = vector.load %arg2[%c0_1, %c0_2] : memref<64x32xf32, #tpu.memory_space<vmem>>, vector<64x32xf32>
    %cst = arith.constant dense<0.000000e+00> : vector<64x16xf32>
    %2 = tpu.matmul %1, %0, %cst {dimension_numbers = #tpu.dot_dimension_numbers<[1], [0], [0], [1], [0, 0, 1, 1], [], []>} : vector<64x32xf32>, vector<32x16xf32>, vector<64x16xf32> -> vector<64x16xf32>
    %c0_3 = arith.constant 0 : index
    %c0_4 = arith.constant 0 : index
    %3 = vector.load %arg3[%c0_3, %c0_4] : memref<64x3xf32, #tpu.memory_space<vmem>>, vector<64x1xf32>
    %4 = vector.broadcast %3 : vector<64x1xf32> to vector<64x16xf32>
    %5 = arith.addf %2, %4 : vector<64x16xf32>
    %c0_5 = arith.constant 0 : index
    %c1 = arith.constant 1 : index
    %6 = vector.load %arg3[%c0_5, %c1] : memref<64x3xf32, #tpu.memory_space<vmem>>, vector<64x1xf32>
    %c0_6 = arith.constant 0 : index
    %c2 = arith.constant 2 : index
    %7 = vector.load %arg3[%c0_6, %c2] : memref<64x3xf32, #tpu.memory_space<vmem>>, vector<64x1xf32>
    %8 = arith.mulf %5, %5 : vector<64x16xf32>
    %cst_7 = arith.constant dense<0.000000e+00> : vector<16xf32>
    %9 = vector.multi_reduction <add>, %8, %cst_7 [0] : vector<64x16xf32> to vector<16xf32>
    %10 = vector.shape_cast %9 : vector<16xf32> to vector<1x16xf32>
    %cst_8 = arith.constant 1.562500e-02 : f32
    %11 = vector.broadcast %cst_8 : f32 to vector<1x16xf32>
    %12 = arith.mulf %10, %11 : vector<1x16xf32>
    %cst_9 = arith.constant 9.99999974E-6 : f32
    %13 = vector.broadcast %cst_9 : f32 to vector<1x16xf32>
    %14 = arith.addf %12, %13 : vector<1x16xf32>
    %15 = math.rsqrt %14 : vector<1x16xf32>
    %16 = vector.broadcast %15 : vector<1x16xf32> to vector<64x16xf32>
    %17 = arith.mulf %5, %16 : vector<64x16xf32>
    %18 = vector.broadcast %6 : vector<64x1xf32> to vector<64x16xf32>
    %19 = arith.mulf %17, %18 : vector<64x16xf32>
    %20 = vector.broadcast %7 : vector<64x1xf32> to vector<64x16xf32>
    %21 = arith.addf %19, %20 : vector<64x16xf32>
    %cst_10 = arith.constant 5.000000e-01 : f32
    %22 = vector.broadcast %cst_10 : f32 to vector<64x16xf32>
    %23 = arith.mulf %22, %21 : vector<64x16xf32>
    %24 = arith.mulf %21, %21 : vector<64x16xf32>
    %25 = arith.mulf %24, %21 : vector<64x16xf32>
    %cst_11 = arith.constant 4.471500e-02 : f32
    %26 = vector.broadcast %cst_11 : f32 to vector<64x16xf32>
    %27 = arith.mulf %26, %25 : vector<64x16xf32>
    %28 = arith.addf %21, %27 : vector<64x16xf32>
    %cst_12 = arith.constant 0.797884583 : f32
    %29 = vector.broadcast %cst_12 : f32 to vector<64x16xf32>
    %30 = arith.mulf %29, %28 : vector<64x16xf32>
    %31 = math.tanh %30 : vector<64x16xf32>
    %cst_13 = arith.constant 1.000000e+00 : f32
    %32 = vector.broadcast %cst_13 : f32 to vector<64x16xf32>
    %33 = arith.addf %32, %31 : vector<64x16xf32>
    %34 = arith.mulf %23, %33 : vector<64x16xf32>
    %c0_14 = arith.constant 0 : index
    %c0_15 = arith.constant 0 : index
    %35 = vector.load %arg4[%c0_14, %c0_15] : memref<48x64xf32, #tpu.memory_space<vmem>>, vector<48x64xf32>
    %cst_16 = arith.constant dense<0.000000e+00> : vector<48x16xf32>
    %36 = tpu.matmul %35, %34, %cst_16 {dimension_numbers = #tpu.dot_dimension_numbers<[1], [0], [0], [1], [0, 0, 1, 1], [], []>} : vector<48x64xf32>, vector<64x16xf32>, vector<48x16xf32> -> vector<48x16xf32>
    %c0_17 = arith.constant 0 : index
    %c0_18 = arith.constant 0 : index
    %37 = vector.load %arg5[%c0_17, %c0_18] : memref<48x3xf32, #tpu.memory_space<vmem>>, vector<48x1xf32>
    %38 = vector.broadcast %37 : vector<48x1xf32> to vector<48x16xf32>
    %39 = arith.addf %36, %38 : vector<48x16xf32>
    %c0_19 = arith.constant 0 : index
    %c1_20 = arith.constant 1 : index
    %40 = vector.load %arg5[%c0_19, %c1_20] : memref<48x3xf32, #tpu.memory_space<vmem>>, vector<48x1xf32>
    %c0_21 = arith.constant 0 : index
    %c2_22 = arith.constant 2 : index
    %41 = vector.load %arg5[%c0_21, %c2_22] : memref<48x3xf32, #tpu.memory_space<vmem>>, vector<48x1xf32>
    %42 = arith.mulf %39, %39 : vector<48x16xf32>
    %cst_23 = arith.constant dense<0.000000e+00> : vector<16xf32>
    %43 = vector.multi_reduction <add>, %42, %cst_23 [0] : vector<48x16xf32> to vector<16xf32>
    %44 = vector.shape_cast %43 : vector<16xf32> to vector<1x16xf32>
    %cst_24 = arith.constant 0.020833334 : f32
    %45 = vector.broadcast %cst_24 : f32 to vector<1x16xf32>
    %46 = arith.mulf %44, %45 : vector<1x16xf32>
    %cst_25 = arith.constant 9.99999974E-6 : f32
    %47 = vector.broadcast %cst_25 : f32 to vector<1x16xf32>
    %48 = arith.addf %46, %47 : vector<1x16xf32>
    %49 = math.rsqrt %48 : vector<1x16xf32>
    %50 = vector.broadcast %49 : vector<1x16xf32> to vector<48x16xf32>
    %51 = arith.mulf %39, %50 : vector<48x16xf32>
    %52 = vector.broadcast %40 : vector<48x1xf32> to vector<48x16xf32>
    %53 = arith.mulf %51, %52 : vector<48x16xf32>
    %54 = vector.broadcast %41 : vector<48x1xf32> to vector<48x16xf32>
    %55 = arith.addf %53, %54 : vector<48x16xf32>
    %cst_26 = arith.constant 5.000000e-01 : f32
    %56 = vector.broadcast %cst_26 : f32 to vector<48x16xf32>
    %57 = arith.mulf %56, %55 : vector<48x16xf32>
    %58 = arith.mulf %55, %55 : vector<48x16xf32>
    %59 = arith.mulf %58, %55 : vector<48x16xf32>
    %cst_27 = arith.constant 4.471500e-02 : f32
    %60 = vector.broadcast %cst_27 : f32 to vector<48x16xf32>
    %61 = arith.mulf %60, %59 : vector<48x16xf32>
    %62 = arith.addf %55, %61 : vector<48x16xf32>
    %cst_28 = arith.constant 0.797884583 : f32
    %63 = vector.broadcast %cst_28 : f32 to vector<48x16xf32>
    %64 = arith.mulf %63, %62 : vector<48x16xf32>
    %65 = math.tanh %64 : vector<48x16xf32>
    %cst_29 = arith.constant 1.000000e+00 : f32
    %66 = vector.broadcast %cst_29 : f32 to vector<48x16xf32>
    %67 = arith.addf %66, %65 : vector<48x16xf32>
    %68 = arith.mulf %57, %67 : vector<48x16xf32>
    %c0_30 = arith.constant 0 : index
    %c0_31 = arith.constant 0 : index
    %69 = vector.load %arg6[%c0_30, %c0_31] : memref<32x48xf32, #tpu.memory_space<vmem>>, vector<32x48xf32>
    %cst_32 = arith.constant dense<0.000000e+00> : vector<32x16xf32>
    %70 = tpu.matmul %69, %68, %cst_32 {dimension_numbers = #tpu.dot_dimension_numbers<[1], [0], [0], [1], [0, 0, 1, 1], [], []>} : vector<32x48xf32>, vector<48x16xf32>, vector<32x16xf32> -> vector<32x16xf32>
    %c0_33 = arith.constant 0 : index
    %c0_34 = arith.constant 0 : index
    %71 = vector.load %arg7[%c0_33, %c0_34] : memref<32x3xf32, #tpu.memory_space<vmem>>, vector<32x1xf32>
    %72 = vector.broadcast %71 : vector<32x1xf32> to vector<32x16xf32>
    %73 = arith.addf %70, %72 : vector<32x16xf32>
    %c0_35 = arith.constant 0 : index
    %c1_36 = arith.constant 1 : index
    %74 = vector.load %arg7[%c0_35, %c1_36] : memref<32x3xf32, #tpu.memory_space<vmem>>, vector<32x1xf32>
    %c0_37 = arith.constant 0 : index
    %c2_38 = arith.constant 2 : index
    %75 = vector.load %arg7[%c0_37, %c2_38] : memref<32x3xf32, #tpu.memory_space<vmem>>, vector<32x1xf32>
    %76 = arith.mulf %73, %73 : vector<32x16xf32>
    %cst_39 = arith.constant dense<0.000000e+00> : vector<16xf32>
    %77 = vector.multi_reduction <add>, %76, %cst_39 [0] : vector<32x16xf32> to vector<16xf32>
    %78 = vector.shape_cast %77 : vector<16xf32> to vector<1x16xf32>
    %cst_40 = arith.constant 3.125000e-02 : f32
    %79 = vector.broadcast %cst_40 : f32 to vector<1x16xf32>
    %80 = arith.mulf %78, %79 : vector<1x16xf32>
    %cst_41 = arith.constant 9.99999974E-6 : f32
    %81 = vector.broadcast %cst_41 : f32 to vector<1x16xf32>
    %82 = arith.addf %80, %81 : vector<1x16xf32>
    %83 = math.rsqrt %82 : vector<1x16xf32>
    %84 = vector.broadcast %83 : vector<1x16xf32> to vector<32x16xf32>
    %85 = arith.mulf %73, %84 : vector<32x16xf32>
    %86 = vector.broadcast %74 : vector<32x1xf32> to vector<32x16xf32>
    %87 = arith.mulf %85, %86 : vector<32x16xf32>
    %88 = vector.broadcast %75 : vector<32x1xf32> to vector<32x16xf32>
    %89 = arith.addf %87, %88 : vector<32x16xf32>
    %90 = arith.addf %89, %0 : vector<32x16xf32>
    %c0_42 = arith.constant 0 : index
    %c0_43 = arith.constant 0 : index
    %91 = vector.load %arg8[%c0_42, %c0_43] : memref<32x16xf32, #tpu.memory_space<vmem>>, vector<32x16xf32>
    tpu.vector_store %arg8[%c0_42, %c0_43], %90 {strides = array<i32>} : memref<32x16xf32, #tpu.memory_space<vmem>>, vector<32x16xf32>,
    return
  }
  func.func @transform_0(%arg0: i32) -> (i32, i32) {
    %c0_i32 = arith.constant 0 : i32
    %c0_i32_0 = arith.constant 0 : i32
    return %c0_i32, %arg0 : i32, i32
  }
  func.func @transform_1(%arg0: i32) -> (i32, i32) {
    %c0_i32 = arith.constant 0 : i32
    %c0_i32_0 = arith.constant 0 : i32
    %c0_i32_1 = arith.constant 0 : i32
    return %c0_i32, %c0_i32_0 : i32, i32
  }
  func.func @transform_2(%arg0: i32) -> (i32, i32) {
    %c0_i32 = arith.constant 0 : i32
    %c0_i32_0 = arith.constant 0 : i32
    %c0_i32_1 = arith.constant 0 : i32
    return %c0_i32, %c0_i32_0 : i32, i32
  }
  func.func @transform_3(%arg0: i32) -> (i32, i32) {
    %c0_i32 = arith.constant 0 : i32
    %c0_i32_0 = arith.constant 0 : i32
    %c0_i32_1 = arith.constant 0 : i32
    return %c0_i32, %c0_i32_0 : i32, i32
  }
  func.func @transform_4(%arg0: i32) -> (i32, i32) {
    %c0_i32 = arith.constant 0 : i32
    %c0_i32_0 = arith.constant 0 : i32
    %c0_i32_1 = arith.constant 0 : i32
    return %c0_i32, %c0_i32_0 : i32, i32
  }
  func.func @transform_5(%arg0: i32) -> (i32, i32) {
    %c0_i32 = arith.constant 0 : i32
    %c0_i32_0 = arith.constant 0 : i32
    %c0_i32_1 = arith.constant 0 : i32
    return %c0_i32, %c0_i32_0 : i32, i32
  }
  func.func @transform_6(%arg0: i32) -> (i32, i32) {
    %c0_i32 = arith.constant 0 : i32
    %c0_i32_0 = arith.constant 0 : i32
    %c0_i32_1 = arith.constant 0 : i32
    return %c0_i32, %c0_i32_0 : i32, i32
  }
  func.func @transform_7(%arg0: i32) -> (i32, i32) {
    %c0_i32 = arith.constant 0 : i32
    %c0_i32_0 = arith.constant 0 : i32
    return %c0_i32, %arg0 : i32, i32
  }
}

module attributes {stable_mosaic.version = 11 : i64} {
  func.func @kernel(%arg0: i32, %arg1: memref<32x16xf32, #tpu.memory_space<vmem>>, %arg2: memref<64x32xf32, #tpu.memory_space<vmem>>, %arg3: memref<64x3xf32, #tpu.memory_space<vmem>>, %arg4: memref<48x64xf32, #tpu.memory_space<vmem>>, %arg5: memref<48x3xf32, #tpu.memory_space<vmem>>, %arg6: memref<32x48xf32, #tpu.memory_space<vmem>>, %arg7: memref<32x3xf32, #tpu.memory_space<vmem>>, %arg8: memref<32x16xf32, #tpu.memory_space<vmem>>) attributes {dimension_semantics = [#tpu.dimension_semantics<parallel>], iteration_bounds = array<i64: 1>, scalar_prefetch = 0 : i64, scratch_operands = 0 : i64, tpu.core_type = #tpu.core_type<tc>, window_params = [{transform_indices = @transform_0, window_bounds = array<i64: 32, 16>}, {pipeline_mode = #tpu.pipeline_mode<synchronous>, transform_indices = @transform_1, window_bounds = array<i64: 64, 32>}, {pipeline_mode = #tpu.pipeline_mode<synchronous>, transform_indices = @transform_2, window_bounds = array<i64: 64, 3>}, {pipeline_mode = #tpu.pipeline_mode<synchronous>, transform_indices = @transform_3, window_bounds = array<i64: 48, 64>}, {pipeline_mode = #tpu.pipeline_mode<synchronous>, transform_indices = @transform_4, window_bounds = array<i64: 48, 3>}, {pipeline_mode = #tpu.pipeline_mode<synchronous>, transform_indices = @transform_5, window_bounds = array<i64: 32, 48>}, {pipeline_mode = #tpu.pipeline_mode<synchronous>, transform_indices = @transform_6, window_bounds = array<i64: 32, 3>}, {transform_indices = @transform_7, window_bounds = array<i64: 32, 16>}]} {
    %c0 = arith.constant 0 : index
    %c0_0 = arith.constant 0 : index
    %0 = vector.load %arg1[%c0, %c0_0] : memref<32x16xf32, #tpu.memory_space<vmem>>, vector<32x16xf32>
    %c0_1 = arith.constant 0 : index
    %c0_2 = arith.constant 0 : index
    %1 = vector.load %arg2[%c0_1, %c0_2] : memref<64x32xf32, #tpu.memory_space<vmem>>, vector<64x32xf32>
    %cst = arith.constant dense<0.000000e+00> : vector<64x16xf32>
    %2 = tpu.matmul %1, %0, %cst {dimension_numbers = #tpu.dot_dimension_numbers<[1], [0], [0], [1], [0, 0, 1, 1], [], []>} : vector<64x32xf32>, vector<32x16xf32>, vector<64x16xf32> -> vector<64x16xf32>
    %c0_3 = arith.constant 0 : index
    %c0_4 = arith.constant 0 : index
    %3 = vector.load %arg3[%c0_3, %c0_4] : memref<64x3xf32, #tpu.memory_space<vmem>>, vector<64x1xf32>
    %4 = vector.broadcast %3 : vector<64x1xf32> to vector<64x16xf32>
    %5 = arith.addf %2, %4 : vector<64x16xf32>
    %c0_5 = arith.constant 0 : index
    %c1 = arith.constant 1 : index
    %6 = vector.load %arg3[%c0_5, %c1] : memref<64x3xf32, #tpu.memory_space<vmem>>, vector<64x1xf32>
    %c0_6 = arith.constant 0 : index
    %c2 = arith.constant 2 : index
    %7 = vector.load %arg3[%c0_6, %c2] : memref<64x3xf32, #tpu.memory_space<vmem>>, vector<64x1xf32>
    %8 = arith.mulf %5, %5 : vector<64x16xf32>
    %cst_7 = arith.constant dense<0.000000e+00> : vector<16xf32>
    %9 = vector.multi_reduction <add>, %8, %cst_7 [0] : vector<64x16xf32> to vector<16xf32>
    %10 = vector.shape_cast %9 : vector<16xf32> to vector<1x16xf32>
    %cst_8 = arith.constant 1.562500e-02 : f32
    %11 = vector.broadcast %cst_8 : f32 to vector<1x16xf32>
    %12 = arith.mulf %10, %11 : vector<1x16xf32>
    %cst_9 = arith.constant 9.99999974E-6 : f32
    %13 = vector.broadcast %cst_9 : f32 to vector<1x16xf32>
    %14 = arith.addf %12, %13 : vector<1x16xf32>
    %15 = math.rsqrt %14 : vector<1x16xf32>
    %16 = vector.broadcast %15 : vector<1x16xf32> to vector<64x16xf32>
    %17 = arith.mulf %5, %16 : vector<64x16xf32>
    %18 = vector.broadcast %6 : vector<64x1xf32> to vector<64x16xf32>
    %19 = arith.mulf %17, %18 : vector<64x16xf32>
    %20 = vector.broadcast %7 : vector<64x1xf32> to vector<64x16xf32>
    %21 = arith.addf %19, %20 : vector<64x16xf32>
    %cst_10 = arith.constant 5.000000e-01 : f32
    %22 = vector.broadcast %cst_10 : f32 to vector<64x16xf32>
    %23 = arith.mulf %22, %21 : vector<64x16xf32>
    %24 = arith.mulf %21, %21 : vector<64x16xf32>
    %25 = arith.mulf %24, %21 : vector<64x16xf32>
    %cst_11 = arith.constant 4.471500e-02 : f32
    %26 = vector.broadcast %cst_11 : f32 to vector<64x16xf32>
    %27 = arith.mulf %26, %25 : vector<64x16xf32>
    %28 = arith.addf %21, %27 : vector<64x16xf32>
    %cst_12 = arith.constant 0.797884583 : f32
    %29 = vector.broadcast %cst_12 : f32 to vector<64x16xf32>
    %30 = arith.mulf %29, %28 : vector<64x16xf32>
    %31 = math.tanh %30 : vector<64x16xf32>
    %cst_13 = arith.constant 1.000000e+00 : f32
    %32 = vector.broadcast %cst_13 : f32 to vector<64x16xf32>
    %33 = arith.addf %32, %31 : vector<64x16xf32>
    %34 = arith.mulf %23, %33 : vector<64x16xf32>
    %c0_14 = arith.constant 0 : index
    %c0_15 = arith.constant 0 : index
    %35 = vector.load %arg4[%c0_14, %c0_15] : memref<48x64xf32, #tpu.memory_space<vmem>>, vector<48x64xf32>
    %cst_16 = arith.constant dense<0.000000e+00> : vector<48x16xf32>
    %36 = tpu.matmul %35, %34, %cst_16 {dimension_numbers = #tpu.dot_dimension_numbers<[1], [0], [0], [1], [0, 0, 1, 1], [], []>} : vector<48x64xf32>, vector<64x16xf32>, vector<48x16xf32> -> vector<48x16xf32>
    %c0_17 = arith.constant 0 : index
    %c0_18 = arith.constant 0 : index
    %37 = vector.load %arg5[%c0_17, %c0_18] : memref<48x3xf32, #tpu.memory_space<vmem>>, vector<48x1xf32>
    %38 = vector.broadcast %37 : vector<48x1xf32> to vector<48x16xf32>
    %39 = arith.addf %36, %38 : vector<48x16xf32>
    %c0_19 = arith.constant 0 : index
    %c1_20 = arith.constant 1 : index
    %40 = vector.load %arg5[%c0_19, %c1_20] : memref<48x3xf32, #tpu.memory_space<vmem>>, vector<48x1xf32>
    %c0_21 = arith.constant 0 : index
    %c2_22 = arith.constant 2 : index
    %41 = vector.load %arg5[%c0_21, %c2_22] : memref<48x3xf32, #tpu.memory_space<vmem>>, vector<48x1xf32>
    %42 = arith.mulf %39, %39 : vector<48x16xf32>
    %cst_23 = arith.constant dense<0.000000e+00> : vector<16xf32>
    %43 = vector.multi_reduction <add>, %42, %cst_23 [0] : vector<48x16xf32> to vector<16xf32>
    %44 = vector.shape_cast %43 : vector<16xf32> to vector<1x16xf32>
    %cst_24 = arith.constant 0.020833334 : f32
    %45 = vector.broadcast %cst_24 : f32 to vector<1x16xf32>
    %46 = arith.mulf %44, %45 : vector<1x16xf32>
    %cst_25 = arith.constant 9.99999974E-6 : f32
    %47 = vector.broadcast %cst_25 : f32 to vector<1x16xf32>
    %48 = arith.addf %46, %47 : vector<1x16xf32>
    %49 = math.rsqrt %48 : vector<1x16xf32>
    %50 = vector.broadcast %49 : vector<1x16xf32> to vector<48x16xf32>
    %51 = arith.mulf %39, %50 : vector<48x16xf32>
    %52 = vector.broadcast %40 : vector<48x1xf32> to vector<48x16xf32>
    %53 = arith.mulf %51, %52 : vector<48x16xf32>
    %54 = vector.broadcast %41 : vector<48x1xf32> to vector<48x16xf32>
    %55 = arith.addf %53, %54 : vector<48x16xf32>
    %cst_26 = arith.constant 5.000000e-01 : f32
    %56 = vector.broadcast %cst_26 : f32 to vector<48x16xf32>
    %57 = arith.mulf %56, %55 : vector<48x16xf32>
    %58 = arith.mulf %55, %55 : vector<48x16xf32>
    %59 = arith.mulf %58, %55 : vector<48x16xf32>
    %cst_27 = arith.constant 4.471500e-02 : f32
    %60 = vector.broadcast %cst_27 : f32 to vector<48x16xf32>
    %61 = arith.mulf %60, %59 : vector<48x16xf32>
    %62 = arith.addf %55, %61 : vector<48x16xf32>
    %cst_28 = arith.constant 0.797884583 : f32
    %63 = vector.broadcast %cst_28 : f32 to vector<48x16xf32>
    %64 = arith.mulf %63, %62 : vector<48x16xf32>
    %65 = math.tanh %64 : vector<48x16xf32>
    %cst_29 = arith.constant 1.000000e+00 : f32
    %66 = vector.broadcast %cst_29 : f32 to vector<48x16xf32>
    %67 = arith.addf %66, %65 : vector<48x16xf32>
    %68 = arith.mulf %57, %67 : vector<48x16xf32>
    %c0_30 = arith.constant 0 : index
    %c0_31 = arith.constant 0 : index
    %69 = vector.load %arg6[%c0_30, %c0_31] : memref<32x48xf32, #tpu.memory_space<vmem>>, vector<32x48xf32>
    %cst_32 = arith.constant dense<0.000000e+00> : vector<32x16xf32>
    %70 = tpu.matmul %69, %68, %cst_32 {dimension_numbers = #tpu.dot_dimension_numbers<[1], [0], [0], [1], [0, 0, 1, 1], [], []>} : vector<32x48xf32>, vector<48x16xf32>, vector<32x16xf32> -> vector<32x16xf32>
    %c0_33 = arith.constant 0 : index
    %c0_34 = arith.constant 0 : index
    %71 = vector.load %arg7[%c0_33, %c0_34] : memref<32x3xf32, #tpu.memory_space<vmem>>, vector<32x1xf32>
    %72 = vector.broadcast %71 : vector<32x1xf32> to vector<32x16xf32>
    %73 = arith.addf %70, %72 : vector<32x16xf32>
    %c0_35 = arith.constant 0 : index
    %c1_36 = arith.constant 1 : index
    %74 = vector.load %arg7[%c0_35, %c1_36] : memref<32x3xf32, #tpu.memory_space<vmem>>, vector<32x1xf32>
    %c0_37 = arith.constant 0 : index
    %c2_38 = arith.constant 2 : index
    %75 = vector.load %arg7[%c0_37, %c2_38] : memref<32x3xf32, #tpu.memory_space<vmem>>, vector<32x1xf32>
    %76 = arith.mulf %73, %73 : vector<32x16xf32>
    %cst_39 = arith.constant dense<0.000000e+00> : vector<16xf32>
    %77 = vector.multi_reduction <add>, %76, %cst_39 [0] : vector<32x16xf32> to vector<16xf32>
    %78 = vector.shape_cast %77 : vector<16xf32> to vector<1x16xf32>
    %cst_40 = arith.constant 3.125000e-02 : f32
    %79 = vector.broadcast %cst_40 : f32 to vector<1x16xf32>
    %80 = arith.mulf %78, %79 : vector<1x16xf32>
    %cst_41 = arith.constant 9.99999974E-6 : f32
    %81 = vector.broadcast %cst_41 : f32 to vector<1x16xf32>
    %82 = arith.addf %80, %81 : vector<1x16xf32>
    %83 = math.rsqrt %82 : vector<1x16xf32>
    %84 = vector.broadcast %83 : vector<1x16xf32> to vector<32x16xf32>
    %85 = arith.mulf %73, %84 : vector<32x16xf32>
    %86 = vector.broadcast %74 : vector<32x1xf32> to vector<32x16xf32>
    %87 = arith.mulf %85, %86 : vector<32x16xf32>
    %88 = vector.broadcast %75 : vector<32x1xf32> to vector<32x16xf32>
    %89 = arith.addf %87, %88 : vector<32x16xf32>
    %90 = arith.addf %89, %0 : vector<32x16xf32>
    %c0_42 = arith.constant 0 : index
    %c0_43 = arith.constant 0 : index
    %91 = vector.load %arg8[%c0_42, %c0_43] : memref<32x16xf32, #tpu.memory_space<vmem>>, vector<32x16xf32>
    tpu.vector_store %arg8[%c0_42, %c0_43], %90 {strides = array<i32>} : memref<32x16xf32, #tpu.memory_space<vmem>>, vector<32x16xf32>,
    return
  }
  func.func @transform_0(%arg0: i32) -> (i32, i32) {
    %c0_i32 = arith.constant 0 : i32
    %c0_i32_0 = arith.constant 0 : i32
    return %c0_i32, %arg0 : i32, i32
  }
  func.func @transform_1(%arg0: i32) -> (i32, i32) {
    %c0_i32 = arith.constant 0 : i32
    %c0_i32_0 = arith.constant 0 : i32
    %c0_i32_1 = arith.constant 0 : i32
    return %c0_i32, %c0_i32_0 : i32, i32
  }
  func.func @transform_2(%arg0: i32) -> (i32, i32) {
    %c0_i32 = arith.constant 0 : i32
    %c0_i32_0 = arith.constant 0 : i32
    %c0_i32_1 = arith.constant 0 : i32
    return %c0_i32, %c0_i32_0 : i32, i32
  }
  func.func @transform_3(%arg0: i32) -> (i32, i32) {
    %c0_i32 = arith.constant 0 : i32
    %c0_i32_0 = arith.constant 0 : i32
    %c0_i32_1 = arith.constant 0 : i32
    return %c0_i32, %c0_i32_0 : i32, i32
  }
  func.func @transform_4(%arg0: i32) -> (i32, i32) {
    %c0_i32 = arith.constant 0 : i32
    %c0_i32_0 = arith.constant 0 : i32
    %c0_i32_1 = arith.constant 0 : i32
    return %c0_i32, %c0_i32_0 : i32, i32
  }
  func.func @transform_5(%arg0: i32) -> (i32, i32) {
    %c0_i32 = arith.constant 0 : i32
    %c0_i32_0 = arith.constant 0 : i32
    %c0_i32_1 = arith.constant 0 : i32
    return %c0_i32, %c0_i32_0 : i32, i32
  }
  func.func @transform_6(%arg0: i32) -> (i32, i32) {
    %c0_i32 = arith.constant 0 : i32
    %c0_i32_0 = arith.constant 0 : i32
    %c0_i32_1 = arith.constant 0 : i32
    return %c0_i32, %c0_i32_0 : i32, i32
  }
  func.func @transform_7(%arg0: i32) -> (i32, i32) {
    %c0_i32 = arith.constant 0 : i32
    %c0_i32_0 = arith.constant 0 : i32
    return %c0_i32, %arg0 : i32, i32
  }
}

</mosaic_0001>

<llo_original>
// kernel: tpu_custom_call.1
$region0: #{tpu_custom_call.1}
  #allocation0 [shape = 'u32[]', space=smem, size = 0x4, offset = 0x4, fixed_abs, tag = 'smem constant byte address 0x4 - core index']
  #allocation1 [shape = 'u32[72,128]{1,0:T(1,128)}', space=vmem, size = 0x9000, scoped, tag = 'internal scratch']
  %s0 = inlined_call_operand.vmem [shape: f32[32,16], index: 0, kind: input, shape index: {}]
  %s1 = inlined_call_operand.vmem [shape: f32[64,32], index: 1, kind: input, shape index: {}]
  %s2 = inlined_call_operand.vmem [shape: f32[64,3], index: 2, kind: input, shape index: {}]
  %s3 = inlined_call_operand.vmem [shape: f32[48,64], index: 3, kind: input, shape index: {}]
  %s4 = inlined_call_operand.vmem [shape: f32[48,3], index: 4, kind: input, shape index: {}]
  %s5 = inlined_call_operand.vmem [shape: f32[32,48], index: 5, kind: input, shape index: {}]
  %s6 = inlined_call_operand.vmem [shape: f32[32,3], index: 6, kind: input, shape index: {}]
  %s7 = inlined_call_operand.vmem [shape: f32[32,16], index: 7, kind: output, shape index: {}]
  %s8 = sld [smem:[#allocation0]]
  $region38: #{tpu_custom_call.1} parent=0
    _
  %s10 = ssub.s32 1, %s8
  %s11 = scalar_select 0, %s10, %s8
  // Predicated region
  $region2: #{tpu_custom_call.1} parent=0 // pred_check
    _
  $region3: #{tpu_custom_call.1} parent=0 // pred_check_branch
    %13 = sbr.rel (0) target = $region5
  $region4: #{tpu_custom_call.1} parent=0 // pred_region
    _
  $region5: #{tpu_custom_call.1} parent=0 // pred_fallthru
    _
  // Predicated region
  $region6: #{tpu_custom_call.1} parent=0 // pred_check
    _
  $region7: #{tpu_custom_call.1} parent=0 // pred_check_branch
    %15 = sbr.rel (0) target = $region9
  $region8: #{tpu_custom_call.1} parent=0 // pred_region
    _
  $region9: #{tpu_custom_call.1} parent=0 // pred_fallthru
    _
  // Predicated region
  $region10: #{tpu_custom_call.1} parent=0 // pred_check
    _
  $region11: #{tpu_custom_call.1} parent=0 // pred_check_branch
    %17 = sbr.rel (0) target = $region13
  $region12: #{tpu_custom_call.1} parent=0 // pred_region
    _
  $region13: #{tpu_custom_call.1} parent=0 // pred_fallthru
    _
  // Predicated region
  $region14: #{tpu_custom_call.1} parent=0 // pred_check
    _
  $region15: #{tpu_custom_call.1} parent=0 // pred_check_branch
    %19 = sbr.rel (0) target = $region17
  $region16: #{tpu_custom_call.1} parent=0 // pred_region
    _
  $region17: #{tpu_custom_call.1} parent=0 // pred_fallthru
    _
  // Predicated region
  $region18: #{tpu_custom_call.1} parent=0 // pred_check
    _
  $region19: #{tpu_custom_call.1} parent=0 // pred_check_branch
    %21 = sbr.rel (0) target = $region21
  $region20: #{tpu_custom_call.1} parent=0 // pred_region
    _
  $region21: #{tpu_custom_call.1} parent=0 // pred_fallthru
    _
  // Predicated region
  $region22: #{tpu_custom_call.1} parent=0 // pred_check
    _
  $region23: #{tpu_custom_call.1} parent=0 // pred_check_branch
    %23 = sbr.rel (0) target = $region25
  $region24: #{tpu_custom_call.1} parent=0 // pred_region
    _
  $region25: #{tpu_custom_call.1} parent=0 // pred_fallthru
    _
  // Predicated region
  $region26: #{tpu_custom_call.1} parent=0 // pred_check
    _
  $region27: #{tpu_custom_call.1} parent=0 // pred_check_branch
    %25 = sbr.rel (0) target = $region29
  $region28: #{tpu_custom_call.1} parent=0 // pred_region
    _
  $region29: #{tpu_custom_call.1} parent=0 // pred_fallthru
    _
  %v26 = vld [vmem:[%s0] sm:$0xff]
  %v27 = vld [vmem:[%s0 + $0x8] sm:$0xff]
  %v28 = vld [vmem:[%s0 + $0x10] sm:$0xff]
  %v29 = vld [vmem:[%s0 + $0x18] sm:$0xff]
  %v30 = vld [vmem:[%s1] sm:$0xff]
  %v31 = vld [vmem:[%s1 + $0x8] sm:$0xff]
  %v32 = vld [vmem:[%s1 + $0x10] sm:$0xff]
  %v33 = vld [vmem:[%s1 + $0x18] sm:$0xff]
  %v34 = vld [vmem:[%s1 + $0x20] sm:$0xff]
  %v35 = vld [vmem:[%s1 + $0x28] sm:$0xff]
  %v36 = vld [vmem:[%s1 + $0x30] sm:$0xff]
  %v37 = vld [vmem:[%s1 + $0x38] sm:$0xff]
  %v38 = vld [vmem:[%s2] sm:$0xff]
  %v39 = vld [vmem:[%s2 + $0x8] sm:$0xff]
  %v40 = vld [vmem:[%s2 + $0x10] sm:$0xff]
  %v41 = vld [vmem:[%s2 + $0x18] sm:$0xff]
  %v42 = vld [vmem:[%s2 + $0x20] sm:$0xff]
  %v43 = vld [vmem:[%s2 + $0x28] sm:$0xff]
  %v44 = vld [vmem:[%s2 + $0x30] sm:$0xff]
  %v45 = vld [vmem:[%s2 + $0x38] sm:$0xff]
  %47 = vset.pattern.permute.xlu0 0
  %48 = vperm.xlu0 %47, %v38
  %v49 = vpop.permute.xlu0 %48
  %52 = vset.pattern.permute.xlu0 0
  %53 = vperm.xlu0 %52, %v39
  %v54 = vpop.permute.xlu0 %53
  %57 = vset.pattern.permute.xlu0 0
  %58 = vperm.xlu0 %57, %v40
  %v59 = vpop.permute.xlu0 %58
  %62 = vset.pattern.permute.xlu0 0
  %63 = vperm.xlu0 %62, %v41
  %v64 = vpop.permute.xlu0 %63
  %67 = vset.pattern.permute.xlu0 0
  %68 = vperm.xlu0 %67, %v42
  %v69 = vpop.permute.xlu0 %68
  %72 = vset.pattern.permute.xlu0 0
  %73 = vperm.xlu0 %72, %v43
  %v74 = vpop.permute.xlu0 %73
  %77 = vset.pattern.permute.xlu0 0
  %78 = vperm.xlu0 %77, %v44
  %v79 = vpop.permute.xlu0 %78
  %82 = vset.pattern.permute.xlu0 0
  %83 = vperm.xlu0 %82, %v45
  %v84 = vpop.permute.xlu0 %83
  %vm86 = vcmask 261120
  %v88 = vsel %vm86, %v30, 0
  %v91 = vsel %vm86, %v31, 0
  %v94 = vsel %vm86, %v32, 0
  %v97 = vsel %vm86, %v33, 0
  %v100 = vsel %vm86, %v34, 0
  %v103 = vsel %vm86, %v35, 0
  %v106 = vsel %vm86, %v36, 0
  %v109 = vsel %vm86, %v37, 0
  %111 = vmatpush.msra.mxu0 0.0
  %112 = vmatpush.msra.mxu0 0.0
  %113 = vmatpush.msra.mxu0 0.0
  %114 = vmatpush.msra.mxu0 0.0
  %115 = vmatpush.msra.mxu0 0.0
  %116 = vmatpush.msra.mxu0 0.0
  %117 = vmatpush.msra.mxu0 0.0
  %118 = vmatpush.msra.mxu0 0.0
  %119 = vmatpush.msra.mxu0 0.0
  %120 = vmatpush.msra.mxu0 0.0
  %121 = vmatpush.msra.mxu0 0.0
  %122 = vmatpush.msra.mxu0 0.0
  %123 = vmatpush.msra.mxu0 %v29
  %124 = vmatpush.msra.mxu0 %v28
  %125 = vmatpush.msra.mxu0 %v27
  %126 = vmatpush.msra.mxu0 %v26
  %127 = vmatmul.f32.gmra.mxu0 %v88
  %v128 = vpop.f32.mrf.mxu0
  %v129 = vadd.f32 %v49, %v128
  %130 = vmatmul.f32.gmra.mxu0 %v91
  %v131 = vpop.f32.mrf.mxu0
  %v132 = vadd.f32 %v54, %v131
  %133 = vmatmul.f32.gmra.mxu0 %v94
  %v134 = vpop.f32.mrf.mxu0
  %v135 = vadd.f32 %v59, %v134
  %136 = vmatmul.f32.gmra.mxu0 %v97
  %v137 = vpop.f32.mrf.mxu0
  %v138 = vadd.f32 %v64, %v137
  %139 = vmatmul.f32.gmra.mxu0 %v100
  %v140 = vpop.f32.mrf.mxu0
  %v141 = vadd.f32 %v69, %v140
  %142 = vmatmul.f32.gmra.mxu0 %v103
  %v143 = vpop.f32.mrf.mxu0
  %v144 = vadd.f32 %v74, %v143
  %145 = vmatmul.f32.gmra.mxu0 %v106
  %v146 = vpop.f32.mrf.mxu0
  %v147 = vadd.f32 %v79, %v146
  %148 = vmatmul.f32.gmra.mxu0 %v109
  %v149 = vpop.f32.mrf.mxu0
  %v150 = vadd.f32 %v84, %v149
  %151 = vdwg.mxu0
  %v152 = vmul.f32 %v129, %v129
  %v153 = vmul.f32 %v132, %v132
  %v154 = vmul.f32 %v135, %v135
  %v155 = vmul.f32 %v138, %v138
  %v156 = vmul.f32 %v141, %v141
  %v157 = vmul.f32 %v144, %v144
  %v158 = vmul.f32 %v147, %v147
  %v159 = vmul.f32 %v150, %v150
  %vm160 = vcmask 130048
  %v161 = vsel %vm160, %v152, 0.0
  %v162 = vsel %vm160, %v153, 0.0
  %v163 = vadd.f32 %v161, %v162
  %v164 = vsel %vm160, %v154, 0.0
  %v165 = vadd.f32 %v163, %v164
  %v166 = vsel %vm160, %v155, 0.0
  %v167 = vadd.f32 %v165, %v166
  %v168 = vsel %vm160, %v156, 0.0
  %v169 = vadd.f32 %v167, %v168
  %v170 = vsel %vm160, %v157, 0.0
  %v171 = vadd.f32 %v169, %v170
  %v172 = vsel %vm160, %v158, 0.0
  %v173 = vadd.f32 %v171, %v172
  %v174 = vsel %vm160, %v159, 0.0
  %v175 = vadd.f32 %v173, %v174
  %v176 = vrot.slane %v175, 4
  %v177 = vadd.f32 %v175, %v176
  %v178 = vrot.slane %v177, 2
  %v179 = vadd.f32 %v177, %v178
  %v180 = vrot.slane %v179, 1
  %v181 = vadd.f32 %v179, %v180
  %v182 = vmul.f32 %v181, 0.015625
  %v183 = vadd.f32 %v182, 1e-05
  %v184 = vrsqrt.pop %v183
  %v185 = vmul.f32 %v184, %v183
  %v186 = vmul.f32 %v185, %v184
  %v187 = vmul.f32 0.5, %v186
  %v188 = vsub.f32 1.5, %v187
  %v189 = vmul.f32 %v184, %v188
  %vm190 = vweird.f32 %v183
  %vm191 = vweird.f32 %v184
  %vm192 = vmor %vm190, %vm191
  %v193 = vsel %vm192, %v184, %v189
  %v194 = vmul.f32 %v129, %v193
  %v195 = vmul.f32 %v132, %v193
  %v196 = vmul.f32 %v135, %v193
  %v197 = vmul.f32 %v138, %v193
  %v198 = vmul.f32 %v141, %v193
  %v199 = vmul.f32 %v144, %v193
  %v200 = vmul.f32 %v147, %v193
  %v201 = vmul.f32 %v150, %v193
  %202 = vset.pattern.permute.xlu0 1
  %203 = vperm.xlu0 %202, %v38
  %v204 = vpop.permute.xlu0 %203
  %206 = vset.pattern.permute.xlu0 1
  %207 = vperm.xlu0 %206, %v39
  %v208 = vpop.permute.xlu0 %207
  %210 = vset.pattern.permute.xlu0 1
  %211 = vperm.xlu0 %210, %v40
  %v212 = vpop.permute.xlu0 %211
  %214 = vset.pattern.permute.xlu0 1
  %215 = vperm.xlu0 %214, %v41
  %v216 = vpop.permute.xlu0 %215
  %218 = vset.pattern.permute.xlu0 1
  %219 = vperm.xlu0 %218, %v42
  %v220 = vpop.permute.xlu0 %219
  %222 = vset.pattern.permute.xlu0 1
  %223 = vperm.xlu0 %222, %v43
  %v224 = vpop.permute.xlu0 %223
  %226 = vset.pattern.permute.xlu0 1
  %227 = vperm.xlu0 %226, %v44
  %v228 = vpop.permute.xlu0 %227
  %230 = vset.pattern.permute.xlu0 1
  %231 = vperm.xlu0 %230, %v45
  %v232 = vpop.permute.xlu0 %231
  %v234 = vmul.f32 %v194, %v204
  %v235 = vmul.f32 %v195, %v208
  %v236 = vmul.f32 %v196, %v212
  %v237 = vmul.f32 %v197, %v216
  %v238 = vmul.f32 %v198, %v220
  %v239 = vmul.f32 %v199, %v224
  %v240 = vmul.f32 %v200, %v228
  %v241 = vmul.f32 %v201, %v232
  %242 = vset.pattern.permute.xlu0 2
  %243 = vperm.xlu0 %242, %v38
  %v244 = vpop.permute.xlu0 %243
  %246 = vset.pattern.permute.xlu0 2
  %247 = vperm.xlu0 %246, %v39
  %v248 = vpop.permute.xlu0 %247
  %250 = vset.pattern.permute.xlu0 2
  %251 = vperm.xlu0 %250, %v40
  %v252 = vpop.permute.xlu0 %251
  %254 = vset.pattern.permute.xlu0 2
  %255 = vperm.xlu0 %254, %v41
  %v256 = vpop.permute.xlu0 %255
  %258 = vset.pattern.permute.xlu0 2
  %259 = vperm.xlu0 %258, %v42
  %v260 = vpop.permute.xlu0 %259
  %262 = vset.pattern.permute.xlu0 2
  %263 = vperm.xlu0 %262, %v43
  %v264 = vpop.permute.xlu0 %263
  %266 = vset.pattern.permute.xlu0 2
  %267 = vperm.xlu0 %266, %v44
  %v268 = vpop.permute.xlu0 %267
  %270 = vset.pattern.permute.xlu0 2
  %271 = vperm.xlu0 %270, %v45
  %v272 = vpop.permute.xlu0 %271
  %v274 = vadd.f32 %v234, %v244
  %v275 = vadd.f32 %v235, %v248
  %v276 = vadd.f32 %v236, %v252
  %v277 = vadd.f32 %v237, %v256
  %v278 = vadd.f32 %v238, %v260
  %v279 = vadd.f32 %v239, %v264
  %v280 = vadd.f32 %v240, %v268
  %v281 = vadd.f32 %v241, %v272
  %v282 = vmul.f32 %v274, 0.5
  %v283 = vmul.f32 %v275, 0.5
  %v284 = vmul.f32 %v276, 0.5
  %v285 = vmul.f32 %v277, 0.5
  %v286 = vmul.f32 %v278, 0.5
  %v287 = vmul.f32 %v279, 0.5
  %v288 = vmul.f32 %v280, 0.5
  %v289 = vmul.f32 %v281, 0.5
  %v290 = vmul.f32 %v274, %v274
  %v291 = vmul.f32 %v275, %v275
  %v292 = vmul.f32 %v276, %v276
  %v293 = vmul.f32 %v277, %v277
  %v294 = vmul.f32 %v278, %v278
  %v295 = vmul.f32 %v279, %v279
  %v296 = vmul.f32 %v280, %v280
  %v297 = vmul.f32 %v281, %v281
  %v298 = vmul.f32 %v290, %v274
  %v299 = vmul.f32 %v291, %v275
  %v300 = vmul.f32 %v292, %v276
  %v301 = vmul.f32 %v293, %v277
  %v302 = vmul.f32 %v294, %v278
  %v303 = vmul.f32 %v295, %v279
  %v304 = vmul.f32 %v296, %v280
  %v305 = vmul.f32 %v297, %v281
  %v306 = vmul.f32 %v298, 0.044715
  %v307 = vmul.f32 %v299, 0.044715
  %v308 = vmul.f32 %v300, 0.044715
  %v309 = vmul.f32 %v301, 0.044715
  %v310 = vmul.f32 %v302, 0.044715
  %v311 = vmul.f32 %v303, 0.044715
  %v312 = vmul.f32 %v304, 0.044715
  %v313 = vmul.f32 %v305, 0.044715
  %v314 = vadd.f32 %v274, %v306
  %v315 = vadd.f32 %v275, %v307
  %v316 = vadd.f32 %v276, %v308
  %v317 = vadd.f32 %v277, %v309
  %v318 = vadd.f32 %v278, %v310
  %v319 = vadd.f32 %v279, %v311
  %v320 = vadd.f32 %v280, %v312
  %v321 = vadd.f32 %v281, %v313
  %v322 = vmul.f32 %v314, 0.7978846
  %v323 = vmul.f32 %v315, 0.7978846
  %v324 = vmul.f32 %v316, 0.7978846
  %v325 = vmul.f32 %v317, 0.7978846
  %v326 = vmul.f32 %v318, 0.7978846
  %v327 = vmul.f32 %v319, 0.7978846
  %v328 = vmul.f32 %v320, 0.7978846
  %v329 = vmul.f32 %v321, 0.7978846
  %v330 = vtanh.pop %v322
  %v331 = vtanh.pop %v323
  %v332 = vtanh.pop %v324
  %v333 = vtanh.pop %v325
  %v334 = vtanh.pop %v326
  %v335 = vtanh.pop %v327
  %v336 = vtanh.pop %v328
  %v337 = vtanh.pop %v329
  %v338 = vadd.f32 %v330, 1.0
  %v339 = vadd.f32 %v331, 1.0
  %v340 = vadd.f32 %v332, 1.0
  %v341 = vadd.f32 %v333, 1.0
  %v342 = vadd.f32 %v334, 1.0
  %v343 = vadd.f32 %v335, 1.0
  %v344 = vadd.f32 %v336, 1.0
  %v345 = vadd.f32 %v337, 1.0
  %v346 = vmul.f32 %v282, %v338
  %v347 = vmul.f32 %v283, %v339
  %v348 = vmul.f32 %v284, %v340
  %v349 = vmul.f32 %v285, %v341
  %v350 = vmul.f32 %v286, %v342
  %v351 = vmul.f32 %v287, %v343
  %v352 = vmul.f32 %v288, %v344
  %v353 = vmul.f32 %v289, %v345
  %v354 = vld [vmem:[%s3] sm:$0xff]
  %v355 = vld [vmem:[%s3 + $0x8] sm:$0xff]
  %v356 = vld [vmem:[%s3 + $0x10] sm:$0xff]
  %v357 = vld [vmem:[%s3 + $0x18] sm:$0xff]
  %v358 = vld [vmem:[%s3 + $0x20] sm:$0xff]
  %v359 = vld [vmem:[%s3 + $0x28] sm:$0xff]
  %v360 = vld [vmem:[%s4] sm:$0xff]
  %v361 = vld [vmem:[%s4 + $0x8] sm:$0xff]
  %v362 = vld [vmem:[%s4 + $0x10] sm:$0xff]
  %v363 = vld [vmem:[%s4 + $0x18] sm:$0xff]
  %v364 = vld [vmem:[%s4 + $0x20] sm:$0xff]
  %v365 = vld [vmem:[%s4 + $0x28] sm:$0xff]
  %367 = vset.pattern.permute.xlu0 0
  %368 = vperm.xlu0 %367, %v360
  %v369 = vpop.permute.xlu0 %368
  %372 = vset.pattern.permute.xlu0 0
  %373 = vperm.xlu0 %372, %v361
  %v374 = vpop.permute.xlu0 %373
  %377 = vset.pattern.permute.xlu0 0
  %378 = vperm.xlu0 %377, %v362
  %v379 = vpop.permute.xlu0 %378
  %382 = vset.pattern.permute.xlu0 0
  %383 = vperm.xlu0 %382, %v363
  %v384 = vpop.permute.xlu0 %383
  %387 = vset.pattern.permute.xlu0 0
  %388 = vperm.xlu0 %387, %v364
  %v389 = vpop.permute.xlu0 %388
  %392 = vset.pattern.permute.xlu0 0
  %393 = vperm.xlu0 %392, %v365
  %v394 = vpop.permute.xlu0 %393
  %vm396 = vcmask 523264
  %v398 = vsel %vm396, %v354, 0
  %v401 = vsel %vm396, %v355, 0
  %v404 = vsel %vm396, %v356, 0
  %v407 = vsel %vm396, %v357, 0
  %v410 = vsel %vm396, %v358, 0
  %v413 = vsel %vm396, %v359, 0
  %415 = vmatpush.msra.mxu0 0.0
  %416 = vmatpush.msra.mxu0 0.0
  %417 = vmatpush.msra.mxu0 0.0
  %418 = vmatpush.msra.mxu0 0.0
  %419 = vmatpush.msra.mxu0 0.0
  %420 = vmatpush.msra.mxu0 0.0
  %421 = vmatpush.msra.mxu0 0.0
  %422 = vmatpush.msra.mxu0 0.0
  %423 = vmatpush.msra.mxu0 %v353
  %424 = vmatpush.msra.mxu0 %v352
  %425 = vmatpush.msra.mxu0 %v351
  %426 = vmatpush.msra.mxu0 %v350
  %427 = vmatpush.msra.mxu0 %v349
  %428 = vmatpush.msra.mxu0 %v348
  %429 = vmatpush.msra.mxu0 %v347
  %430 = vmatpush.msra.mxu0 %v346
  %431 = vmatmul.f32.gmra.mxu0 %v398
  %v432 = vpop.f32.mrf.mxu0
  %v433 = vadd.f32 %v369, %v432
  %434 = vmatmul.f32.gmra.mxu0 %v401
  %v435 = vpop.f32.mrf.mxu0
  %v436 = vadd.f32 %v374, %v435
  %437 = vmatmul.f32.gmra.mxu0 %v404
  %v438 = vpop.f32.mrf.mxu0
  %v439 = vadd.f32 %v379, %v438
  %440 = vmatmul.f32.gmra.mxu0 %v407
  %v441 = vpop.f32.mrf.mxu0
  %v442 = vadd.f32 %v384, %v441
  %443 = vmatmul.f32.gmra.mxu0 %v410
  %v444 = vpop.f32.mrf.mxu0
  %v445 = vadd.f32 %v389, %v444
  %446 = vmatmul.f32.gmra.mxu0 %v413
  %v447 = vpop.f32.mrf.mxu0
  %v448 = vadd.f32 %v394, %v447
  %449 = vdwg.mxu0
  %v450 = vmul.f32 %v433, %v433
  %v451 = vmul.f32 %v436, %v436
  %v452 = vmul.f32 %v439, %v439
  %v453 = vmul.f32 %v442, %v442
  %v454 = vmul.f32 %v445, %v445
  %v455 = vmul.f32 %v448, %v448
  %v456 = vsel %vm160, %v450, 0.0
  %v457 = vsel %vm160, %v451, 0.0
  %v458 = vadd.f32 %v456, %v457
  %v459 = vsel %vm160, %v452, 0.0
  %v460 = vadd.f32 %v458, %v459
  %v461 = vsel %vm160, %v453, 0.0
  %v462 = vadd.f32 %v460, %v461
  %v463 = vsel %vm160, %v454, 0.0
  %v464 = vadd.f32 %v462, %v463
  %v465 = vsel %vm160, %v455, 0.0
  %v466 = vadd.f32 %v464, %v465
  %v467 = vrot.slane %v466, 4
  %v468 = vadd.f32 %v466, %v467
  %v469 = vrot.slane %v468, 2
  %v470 = vadd.f32 %v468, %v469
  %v471 = vrot.slane %v470, 1
  %v472 = vadd.f32 %v470, %v471
  %v473 = vmul.f32 %v472, 0.020833334
  %v474 = vadd.f32 %v473, 1e-05
  %v475 = vrsqrt.pop %v474
  %v476 = vmul.f32 %v475, %v474
  %v477 = vmul.f32 %v476, %v475
  %v478 = vmul.f32 0.5, %v477
  %v479 = vsub.f32 1.5, %v478
  %v480 = vmul.f32 %v475, %v479
  %vm481 = vweird.f32 %v474
  %vm482 = vweird.f32 %v475
  %vm483 = vmor %vm481, %vm482
  %v484 = vsel %vm483, %v475, %v480
  %v485 = vmul.f32 %v433, %v484
  %v486 = vmul.f32 %v436, %v484
  %v487 = vmul.f32 %v439, %v484
  %v488 = vmul.f32 %v442, %v484
  %v489 = vmul.f32 %v445, %v484
  %v490 = vmul.f32 %v448, %v484
  %491 = vset.pattern.permute.xlu0 1
  %492 = vperm.xlu0 %491, %v360
  %v493 = vpop.permute.xlu0 %492
  %495 = vset.pattern.permute.xlu0 1
  %496 = vperm.xlu0 %495, %v361
  %v497 = vpop.permute.xlu0 %496
  %499 = vset.pattern.permute.xlu0 1
  %500 = vperm.xlu0 %499, %v362
  %v501 = vpop.permute.xlu0 %500
  %503 = vset.pattern.permute.xlu0 1
  %504 = vperm.xlu0 %503, %v363
  %v505 = vpop.permute.xlu0 %504
  %507 = vset.pattern.permute.xlu0 1
  %508 = vperm.xlu0 %507, %v364
  %v509 = vpop.permute.xlu0 %508
  %511 = vset.pattern.permute.xlu0 1
  %512 = vperm.xlu0 %511, %v365
  %v513 = vpop.permute.xlu0 %512
  %v515 = vmul.f32 %v485, %v493
  %v516 = vmul.f32 %v486, %v497
  %v517 = vmul.f32 %v487, %v501
  %v518 = vmul.f32 %v488, %v505
  %v519 = vmul.f32 %v489, %v509
  %v520 = vmul.f32 %v490, %v513
  %521 = vset.pattern.permute.xlu0 2
  %522 = vperm.xlu0 %521, %v360
  %v523 = vpop.permute.xlu0 %522
  %525 = vset.pattern.permute.xlu0 2
  %526 = vperm.xlu0 %525, %v361
  %v527 = vpop.permute.xlu0 %526
  %529 = vset.pattern.permute.xlu0 2
  %530 = vperm.xlu0 %529, %v362
  %v531 = vpop.permute.xlu0 %530
  %533 = vset.pattern.permute.xlu0 2
  %534 = vperm.xlu0 %533, %v363
  %v535 = vpop.permute.xlu0 %534
  %537 = vset.pattern.permute.xlu0 2
  %538 = vperm.xlu0 %537, %v364
  %v539 = vpop.permute.xlu0 %538
  %541 = vset.pattern.permute.xlu0 2
  %542 = vperm.xlu0 %541, %v365
  %v543 = vpop.permute.xlu0 %542
  %v545 = vadd.f32 %v515, %v523
  %v546 = vadd.f32 %v516, %v527
  %v547 = vadd.f32 %v517, %v531
  %v548 = vadd.f32 %v518, %v535
  %v549 = vadd.f32 %v519, %v539
  %v550 = vadd.f32 %v520, %v543
  %v551 = vmul.f32 %v545, 0.5
  %v552 = vmul.f32 %v546, 0.5
  %v553 = vmul.f32 %v547, 0.5
  %v554 = vmul.f32 %v548, 0.5
  %v555 = vmul.f32 %v549, 0.5
  %v556 = vmul.f32 %v550, 0.5
  %v557 = vmul.f32 %v545, %v545
  %v558 = vmul.f32 %v546, %v546
  %v559 = vmul.f32 %v547, %v547
  %v560 = vmul.f32 %v548, %v548
  %v561 = vmul.f32 %v549, %v549
  %v562 = vmul.f32 %v550, %v550
  %v563 = vmul.f32 %v557, %v545
  %v564 = vmul.f32 %v558, %v546
  %v565 = vmul.f32 %v559, %v547
  %v566 = vmul.f32 %v560, %v548
  %v567 = vmul.f32 %v561, %v549
  %v568 = vmul.f32 %v562, %v550
  %v569 = vmul.f32 %v563, 0.044715
  %v570 = vmul.f32 %v564, 0.044715
  %v571 = vmul.f32 %v565, 0.044715
  %v572 = vmul.f32 %v566, 0.044715
  %v573 = vmul.f32 %v567, 0.044715
  %v574 = vmul.f32 %v568, 0.044715
  %v575 = vadd.f32 %v545, %v569
  %v576 = vadd.f32 %v546, %v570
  %v577 = vadd.f32 %v547, %v571
  %v578 = vadd.f32 %v548, %v572
  %v579 = vadd.f32 %v549, %v573
  %v580 = vadd.f32 %v550, %v574
  %v581 = vmul.f32 %v575, 0.7978846
  %v582 = vmul.f32 %v576, 0.7978846
  %v583 = vmul.f32 %v577, 0.7978846
  %v584 = vmul.f32 %v578, 0.7978846
  %v585 = vmul.f32 %v579, 0.7978846
  %v586 = vmul.f32 %v580, 0.7978846
  %v587 = vtanh.pop %v581
  %v588 = vtanh.pop %v582
  %v589 = vtanh.pop %v583
  %v590 = vtanh.pop %v584
  %v591 = vtanh.pop %v585
  %v592 = vtanh.pop %v586
  %v593 = vadd.f32 %v587, 1.0
  %v594 = vadd.f32 %v588, 1.0
  %v595 = vadd.f32 %v589, 1.0
  %v596 = vadd.f32 %v590, 1.0
  %v597 = vadd.f32 %v591, 1.0
  %v598 = vadd.f32 %v592, 1.0
  %v599 = vmul.f32 %v551, %v593
  %v600 = vmul.f32 %v552, %v594
  %v601 = vmul.f32 %v553, %v595
  %v602 = vmul.f32 %v554, %v596
  %v603 = vmul.f32 %v555, %v597
  %v604 = vmul.f32 %v556, %v598
  %v605 = vld [vmem:[%s5] sm:$0xff]
  %v606 = vld [vmem:[%s5 + $0x8] sm:$0xff]
  %v607 = vld [vmem:[%s5 + $0x10] sm:$0xff]
  %v608 = vld [vmem:[%s5 + $0x18] sm:$0xff]
  %v609 = vld [vmem:[%s6] sm:$0xff]
  %v610 = vld [vmem:[%s6 + $0x8] sm:$0xff]
  %v611 = vld [vmem:[%s6 + $0x10] sm:$0xff]
  %v612 = vld [vmem:[%s6 + $0x18] sm:$0xff]
  %614 = vset.pattern.permute.xlu0 0
  %615 = vperm.xlu0 %614, %v609
  %v616 = vpop.permute.xlu0 %615
  %619 = vset.pattern.permute.xlu0 0
  %620 = vperm.xlu0 %619, %v610
  %v621 = vpop.permute.xlu0 %620
  %624 = vset.pattern.permute.xlu0 0
  %625 = vperm.xlu0 %624, %v611
  %v626 = vpop.permute.xlu0 %625
  %629 = vset.pattern.permute.xlu0 0
  %630 = vperm.xlu0 %629, %v612
  %v631 = vpop.permute.xlu0 %630
  %vm633 = vcmask 392192
  %v635 = vsel %vm633, %v605, 0
  %v638 = vsel %vm633, %v606, 0
  %v641 = vsel %vm633, %v607, 0
  %v644 = vsel %vm633, %v608, 0
  %646 = vmatpush.msra.mxu0 0.0
  %647 = vmatpush.msra.mxu0 0.0
  %648 = vmatpush.msra.mxu0 0.0
  %649 = vmatpush.msra.mxu0 0.0
  %650 = vmatpush.msra.mxu0 0.0
  %651 = vmatpush.msra.mxu0 0.0
  %652 = vmatpush.msra.mxu0 0.0
  %653 = vmatpush.msra.mxu0 0.0
  %654 = vmatpush.msra.mxu0 0.0
  %655 = vmatpush.msra.mxu0 0.0
  %656 = vmatpush.msra.mxu0 %v604
  %657 = vmatpush.msra.mxu0 %v603
  %658 = vmatpush.msra.mxu0 %v602
  %659 = vmatpush.msra.mxu0 %v601
  %660 = vmatpush.msra.mxu0 %v600
  %661 = vmatpush.msra.mxu0 %v599
  %662 = vmatmul.f32.gmra.mxu0 %v635
  %v663 = vpop.f32.mrf.mxu0
  %v664 = vadd.f32 %v616, %v663
  %665 = vmatmul.f32.gmra.mxu0 %v638
  %v666 = vpop.f32.mrf.mxu0
  %v667 = vadd.f32 %v621, %v666
  %668 = vmatmul.f32.gmra.mxu0 %v641
  %v669 = vpop.f32.mrf.mxu0
  %v670 = vadd.f32 %v626, %v669
  %671 = vmatmul.f32.gmra.mxu0 %v644
  %v672 = vpop.f32.mrf.mxu0
  %v673 = vadd.f32 %v631, %v672
  %674 = vdwg.mxu0
  %v675 = vmul.f32 %v664, %v664
  %v676 = vmul.f32 %v667, %v667
  %v677 = vmul.f32 %v670, %v670
  %v678 = vmul.f32 %v673, %v673
  %v679 = vsel %vm160, %v675, 0.0
  %v680 = vsel %vm160, %v676, 0.0
  %v681 = vadd.f32 %v679, %v680
  %v682 = vsel %vm160, %v677, 0.0
  %v683 = vadd.f32 %v681, %v682
  %v684 = vsel %vm160, %v678, 0.0
  %v685 = vadd.f32 %v683, %v684
  %v686 = vrot.slane %v685, 4
  %v687 = vadd.f32 %v685, %v686
  %v688 = vrot.slane %v687, 2
  %v689 = vadd.f32 %v687, %v688
  %v690 = vrot.slane %v689, 1
  %v691 = vadd.f32 %v689, %v690
  %v692 = vmul.f32 %v691, 0.03125
  %v693 = vadd.f32 %v692, 1e-05
  %v694 = vrsqrt.pop %v693
  %v695 = vmul.f32 %v694, %v693
  %v696 = vmul.f32 %v695, %v694
  %v697 = vmul.f32 0.5, %v696
  %v698 = vsub.f32 1.5, %v697
  %v699 = vmul.f32 %v694, %v698
  %vm700 = vweird.f32 %v693
  %vm701 = vweird.f32 %v694
  %vm702 = vmor %vm700, %vm701
  %v703 = vsel %vm702, %v694, %v699
  %v704 = vmul.f32 %v664, %v703
  %v705 = vmul.f32 %v667, %v703
  %v706 = vmul.f32 %v670, %v703
  %v707 = vmul.f32 %v673, %v703
  %708 = vset.pattern.permute.xlu0 1
  %709 = vperm.xlu0 %708, %v609
  %v710 = vpop.permute.xlu0 %709
  %712 = vset.pattern.permute.xlu0 1
  %713 = vperm.xlu0 %712, %v610
  %v714 = vpop.permute.xlu0 %713
  %716 = vset.pattern.permute.xlu0 1
  %717 = vperm.xlu0 %716, %v611
  %v718 = vpop.permute.xlu0 %717
  %720 = vset.pattern.permute.xlu0 1
  %721 = vperm.xlu0 %720, %v612
  %v722 = vpop.permute.xlu0 %721
  %v724 = vmul.f32 %v704, %v710
  %v725 = vmul.f32 %v705, %v714
  %v726 = vmul.f32 %v706, %v718
  %v727 = vmul.f32 %v707, %v722
  %728 = vset.pattern.permute.xlu0 2
  %729 = vperm.xlu0 %728, %v609
  %v730 = vpop.permute.xlu0 %729
  %732 = vset.pattern.permute.xlu0 2
  %733 = vperm.xlu0 %732, %v610
  %v734 = vpop.permute.xlu0 %733
  %736 = vset.pattern.permute.xlu0 2
  %737 = vperm.xlu0 %736, %v611
  %v738 = vpop.permute.xlu0 %737
  %740 = vset.pattern.permute.xlu0 2
  %741 = vperm.xlu0 %740, %v612
  %v742 = vpop.permute.xlu0 %741
  %v744 = vadd.f32 %v724, %v730
  %v745 = vadd.f32 %v725, %v734
  %v746 = vadd.f32 %v726, %v738
  %v747 = vadd.f32 %v727, %v742
  %v748 = vadd.f32 %v744, %v26
  %v749 = vadd.f32 %v745, %v27
  %v750 = vadd.f32 %v746, %v28
  %v751 = vadd.f32 %v747, %v29
  %752 = vst.msk [vmem:[%s7] sm:$0xff] %vm160, %v748
  %753 = vst.msk [vmem:[%s7 + $0x8] sm:$0xff] %vm160, %v749
  %754 = vst.msk [vmem:[%s7 + $0x10] sm:$0xff] %vm160, %v750
  %755 = vst.msk [vmem:[%s7 + $0x18] sm:$0xff] %vm160, %v751
  // Predicated region
  $region30: #{tpu_custom_call.1} parent=0 // pred_check
    _
  $region31: #{tpu_custom_call.1} parent=0 // pred_check_branch
    %757 = sbr.rel (0) target = $region33
  $region32: #{tpu_custom_call.1} parent=0 // pred_region
    _
  $region33: #{tpu_custom_call.1} parent=0 // pred_fallthru
    _
  // Predicated region
  $region34: #{tpu_custom_call.1} parent=0 // pred_check
    _
  $region35: #{tpu_custom_call.1} parent=0 // pred_check_branch
    %759 = sbr.rel (0) target = $region37
  $region36: #{tpu_custom_call.1} parent=0 // pred_region
    _
  $region37: #{tpu_custom_call.1} parent=0 // pred_fallthru
    _

// kernel: tpu_custom_call.1
$region0: #{tpu_custom_call.1}
  #allocation0 [shape = 'u32[]', space=smem, size = 0x4, offset = 0x4, fixed_abs, tag = 'smem constant byte address 0x4 - core index']
  #allocation1 [shape = 'u32[72,128]{1,0:T(1,128)}', space=vmem, size = 0x9000, scoped, tag = 'internal scratch']
  %s0 = inlined_call_operand.vmem [shape: f32[32,16], index: 0, kind: input, shape index: {}]
  %s1 = inlined_call_operand.vmem [shape: f32[64,32], index: 1, kind: input, shape index: {}]
  %s2 = inlined_call_operand.vmem [shape: f32[64,3], index: 2, kind: input, shape index: {}]
  %s3 = inlined_call_operand.vmem [shape: f32[48,64], index: 3, kind: input, shape index: {}]
  %s4 = inlined_call_operand.vmem [shape: f32[48,3], index: 4, kind: input, shape index: {}]
  %s5 = inlined_call_operand.vmem [shape: f32[32,48], index: 5, kind: input, shape index: {}]
  %s6 = inlined_call_operand.vmem [shape: f32[32,3], index: 6, kind: input, shape index: {}]
  %s7 = inlined_call_operand.vmem [shape: f32[32,16], index: 7, kind: output, shape index: {}]
  %s8 = sld [smem:[#allocation0]]
  $region38: #{tpu_custom_call.1} parent=0
    _
  %s10 = ssub.s32 1, %s8
  %s11 = scalar_select 0, %s10, %s8
  // Predicated region
  $region2: #{tpu_custom_call.1} parent=0 // pred_check
    _
  $region3: #{tpu_custom_call.1} parent=0 // pred_check_branch
    %13 = sbr.rel (0) target = $region5
  $region4: #{tpu_custom_call.1} parent=0 // pred_region
    _
  $region5: #{tpu_custom_call.1} parent=0 // pred_fallthru
    _
  // Predicated region
  $region6: #{tpu_custom_call.1} parent=0 // pred_check
    _
  $region7: #{tpu_custom_call.1} parent=0 // pred_check_branch
    %15 = sbr.rel (0) target = $region9
  $region8: #{tpu_custom_call.1} parent=0 // pred_region
    _
  $region9: #{tpu_custom_call.1} parent=0 // pred_fallthru
    _
  // Predicated region
  $region10: #{tpu_custom_call.1} parent=0 // pred_check
    _
  $region11: #{tpu_custom_call.1} parent=0 // pred_check_branch
    %17 = sbr.rel (0) target = $region13
  $region12: #{tpu_custom_call.1} parent=0 // pred_region
    _
  $region13: #{tpu_custom_call.1} parent=0 // pred_fallthru
    _
  // Predicated region
  $region14: #{tpu_custom_call.1} parent=0 // pred_check
    _
  $region15: #{tpu_custom_call.1} parent=0 // pred_check_branch
    %19 = sbr.rel (0) target = $region17
  $region16: #{tpu_custom_call.1} parent=0 // pred_region
    _
  $region17: #{tpu_custom_call.1} parent=0 // pred_fallthru
    _
  // Predicated region
  $region18: #{tpu_custom_call.1} parent=0 // pred_check
    _
  $region19: #{tpu_custom_call.1} parent=0 // pred_check_branch
    %21 = sbr.rel (0) target = $region21
  $region20: #{tpu_custom_call.1} parent=0 // pred_region
    _
  $region21: #{tpu_custom_call.1} parent=0 // pred_fallthru
    _
  // Predicated region
  $region22: #{tpu_custom_call.1} parent=0 // pred_check
    _
  $region23: #{tpu_custom_call.1} parent=0 // pred_check_branch
    %23 = sbr.rel (0) target = $region25
  $region24: #{tpu_custom_call.1} parent=0 // pred_region
    _
  $region25: #{tpu_custom_call.1} parent=0 // pred_fallthru
    _
  // Predicated region
  $region26: #{tpu_custom_call.1} parent=0 // pred_check
    _
  $region27: #{tpu_custom_call.1} parent=0 // pred_check_branch
    %25 = sbr.rel (0) target = $region29
  $region28: #{tpu_custom_call.1} parent=0 // pred_region
    _
  $region29: #{tpu_custom_call.1} parent=0 // pred_fallthru
    _
  %v26 = vld [vmem:[%s0] sm:$0xff]
  %v27 = vld [vmem:[%s0 + $0x8] sm:$0xff]
  %v28 = vld [vmem:[%s0 + $0x10] sm:$0xff]
  %v29 = vld [vmem:[%s0 + $0x18] sm:$0xff]
  %v30 = vld [vmem:[%s1] sm:$0xff]
  %v31 = vld [vmem:[%s1 + $0x8] sm:$0xff]
  %v32 = vld [vmem:[%s1 + $0x10] sm:$0xff]
  %v33 = vld [vmem:[%s1 + $0x18] sm:$0xff]
  %v34 = vld [vmem:[%s1 + $0x20] sm:$0xff]
  %v35 = vld [vmem:[%s1 + $0x28] sm:$0xff]
  %v36 = vld [vmem:[%s1 + $0x30] sm:$0xff]
  %v37 = vld [vmem:[%s1 + $0x38] sm:$0xff]
  %v38 = vld [vmem:[%s2] sm:$0xff]
  %v39 = vld [vmem:[%s2 + $0x8] sm:$0xff]
  %v40 = vld [vmem:[%s2 + $0x10] sm:$0xff]
  %v41 = vld [vmem:[%s2 + $0x18] sm:$0xff]
  %v42 = vld [vmem:[%s2 + $0x20] sm:$0xff]
  %v43 = vld [vmem:[%s2 + $0x28] sm:$0xff]
  %v44 = vld [vmem:[%s2 + $0x30] sm:$0xff]
  %v45 = vld [vmem:[%s2 + $0x38] sm:$0xff]
  %47 = vset.pattern.permute.xlu0 0
  %48 = vperm.xlu0 %47, %v38
  %v49 = vpop.permute.xlu0 %48
  %52 = vset.pattern.permute.xlu0 0
  %53 = vperm.xlu0 %52, %v39
  %v54 = vpop.permute.xlu0 %53
  %57 = vset.pattern.permute.xlu0 0
  %58 = vperm.xlu0 %57, %v40
  %v59 = vpop.permute.xlu0 %58
  %62 = vset.pattern.permute.xlu0 0
  %63 = vperm.xlu0 %62, %v41
  %v64 = vpop.permute.xlu0 %63
  %67 = vset.pattern.permute.xlu0 0
  %68 = vperm.xlu0 %67, %v42
  %v69 = vpop.permute.xlu0 %68
  %72 = vset.pattern.permute.xlu0 0
  %73 = vperm.xlu0 %72, %v43
  %v74 = vpop.permute.xlu0 %73
  %77 = vset.pattern.permute.xlu0 0
  %78 = vperm.xlu0 %77, %v44
  %v79 = vpop.permute.xlu0 %78
  %82 = vset.pattern.permute.xlu0 0
  %83 = vperm.xlu0 %82, %v45
  %v84 = vpop.permute.xlu0 %83
  %vm86 = vcmask 261120
  %v88 = vsel %vm86, %v30, 0
  %v91 = vsel %vm86, %v31, 0
  %v94 = vsel %vm86, %v32, 0
  %v97 = vsel %vm86, %v33, 0
  %v100 = vsel %vm86, %v34, 0
  %v103 = vsel %vm86, %v35, 0
  %v106 = vsel %vm86, %v36, 0
  %v109 = vsel %vm86, %v37, 0
  %111 = vmatpush.msra.mxu0 0.0
  %112 = vmatpush.msra.mxu0 0.0
  %113 = vmatpush.msra.mxu0 0.0
  %114 = vmatpush.msra.mxu0 0.0
  %115 = vmatpush.msra.mxu0 0.0
  %116 = vmatpush.msra.mxu0 0.0
  %117 = vmatpush.msra.mxu0 0.0
  %118 = vmatpush.msra.mxu0 0.0
  %119 = vmatpush.msra.mxu0 0.0
  %120 = vmatpush.msra.mxu0 0.0
  %121 = vmatpush.msra.mxu0 0.0
  %122 = vmatpush.msra.mxu0 0.0
  %123 = vmatpush.msra.mxu0 %v29
  %124 = vmatpush.msra.mxu0 %v28
  %125 = vmatpush.msra.mxu0 %v27
  %126 = vmatpush.msra.mxu0 %v26
  %127 = vmatmul.f32.gmra.mxu0 %v88
  %v128 = vpop.f32.mrf.mxu0
  %v129 = vadd.f32 %v49, %v128
  %130 = vmatmul.f32.gmra.mxu0 %v91
  %v131 = vpop.f32.mrf.mxu0
  %v132 = vadd.f32 %v54, %v131
  %133 = vmatmul.f32.gmra.mxu0 %v94
  %v134 = vpop.f32.mrf.mxu0
  %v135 = vadd.f32 %v59, %v134
  %136 = vmatmul.f32.gmra.mxu0 %v97
  %v137 = vpop.f32.mrf.mxu0
  %v138 = vadd.f32 %v64, %v137
  %139 = vmatmul.f32.gmra.mxu0 %v100
  %v140 = vpop.f32.mrf.mxu0
  %v141 = vadd.f32 %v69, %v140
  %142 = vmatmul.f32.gmra.mxu0 %v103
  %v143 = vpop.f32.mrf.mxu0
  %v144 = vadd.f32 %v74, %v143
  %145 = vmatmul.f32.gmra.mxu0 %v106
  %v146 = vpop.f32.mrf.mxu0
  %v147 = vadd.f32 %v79, %v146
  %148 = vmatmul.f32.gmra.mxu0 %v109
  %v149 = vpop.f32.mrf.mxu0
  %v150 = vadd.f32 %v84, %v149
  %151 = vdwg.mxu0
  %v152 = vmul.f32 %v129, %v129
  %v153 = vmul.f32 %v132, %v132
  %v154 = vmul.f32 %v135, %v135
  %v155 = vmul.f32 %v138, %v138
  %v156 = vmul.f32 %v141, %v141
  %v157 = vmul.f32 %v144, %v144
  %v158 = vmul.f32 %v147, %v147
  %v159 = vmul.f32 %v150, %v150
  %vm160 = vcmask 130048
  %v161 = vsel %vm160, %v152, 0.0
  %v162 = vsel %vm160, %v153, 0.0
  %v163 = vadd.f32 %v161, %v162
  %v164 = vsel %vm160, %v154, 0.0
  %v165 = vadd.f32 %v163, %v164
  %v166 = vsel %vm160, %v155, 0.0
  %v167 = vadd.f32 %v165, %v166
  %v168 = vsel %vm160, %v156, 0.0
  %v169 = vadd.f32 %v167, %v168
  %v170 = vsel %vm160, %v157, 0.0
  %v171 = vadd.f32 %v169, %v170
  %v172 = vsel %vm160, %v158, 0.0
  %v173 = vadd.f32 %v171, %v172
  %v174 = vsel %vm160, %v159, 0.0
  %v175 = vadd.f32 %v173, %v174
  %v176 = vrot.slane %v175, 4
  %v177 = vadd.f32 %v175, %v176
  %v178 = vrot.slane %v177, 2
  %v179 = vadd.f32 %v177, %v178
  %v180 = vrot.slane %v179, 1
  %v181 = vadd.f32 %v179, %v180
  %v182 = vmul.f32 %v181, 0.015625
  %v183 = vadd.f32 %v182, 1e-05
  %v184 = vrsqrt.pop %v183
  %v185 = vmul.f32 %v184, %v183
  %v186 = vmul.f32 %v185, %v184
  %v187 = vmul.f32 0.5, %v186
  %v188 = vsub.f32 1.5, %v187
  %v189 = vmul.f32 %v184, %v188
  %vm190 = vweird.f32 %v183
  %vm191 = vweird.f32 %v184
  %vm192 = vmor %vm190, %vm191
  %v193 = vsel %vm192, %v184, %v189
  %v194 = vmul.f32 %v129, %v193
  %v195 = vmul.f32 %v132, %v193
  %v196 = vmul.f32 %v135, %v193
  %v197 = vmul.f32 %v138, %v193
  %v198 = vmul.f32 %v141, %v193
  %v199 = vmul.f32 %v144, %v193
  %v200 = vmul.f32 %v147, %v193
  %v201 = vmul.f32 %v150, %v193
  %202 = vset.pattern.permute.xlu0 1
  %203 = vperm.xlu0 %202, %v38
  %v204 = vpop.permute.xlu0 %203
  %206 = vset.pattern.permute.xlu0 1
  %207 = vperm.xlu0 %206, %v39
  %v208 = vpop.permute.xlu0 %207
  %210 = vset.pattern.permute.xlu0 1
  %211 = vperm.xlu0 %210, %v40
  %v212 = vpop.permute.xlu0 %211
  %214 = vset.pattern.permute.xlu0 1
  %215 = vperm.xlu0 %214, %v41
  %v216 = vpop.permute.xlu0 %215
  %218 = vset.pattern.permute.xlu0 1
  %219 = vperm.xlu0 %218, %v42
  %v220 = vpop.permute.xlu0 %219
  %222 = vset.pattern.permute.xlu0 1
  %223 = vperm.xlu0 %222, %v43
  %v224 = vpop.permute.xlu0 %223
  %226 = vset.pattern.permute.xlu0 1
  %227 = vperm.xlu0 %226, %v44
  %v228 = vpop.permute.xlu0 %227
  %230 = vset.pattern.permute.xlu0 1
  %231 = vperm.xlu0 %230, %v45
  %v232 = vpop.permute.xlu0 %231
  %v234 = vmul.f32 %v194, %v204
  %v235 = vmul.f32 %v195, %v208
  %v236 = vmul.f32 %v196, %v212
  %v237 = vmul.f32 %v197, %v216
  %v238 = vmul.f32 %v198, %v220
  %v239 = vmul.f32 %v199, %v224
  %v240 = vmul.f32 %v200, %v228
  %v241 = vmul.f32 %v201, %v232
  %242 = vset.pattern.permute.xlu0 2
  %243 = vperm.xlu0 %242, %v38
  %v244 = vpop.permute.xlu0 %243
  %246 = vset.pattern.permute.xlu0 2
  %247 = vperm.xlu0 %246, %v39
  %v248 = vpop.permute.xlu0 %247
  %250 = vset.pattern.permute.xlu0 2
  %251 = vperm.xlu0 %250, %v40
  %v252 = vpop.permute.xlu0 %251
  %254 = vset.pattern.permute.xlu0 2
  %255 = vperm.xlu0 %254, %v41
  %v256 = vpop.permute.xlu0 %255
  %258 = vset.pattern.permute.xlu0 2
  %259 = vperm.xlu0 %258, %v42
  %v260 = vpop.permute.xlu0 %259
  %262 = vset.pattern.permute.xlu0 2
  %263 = vperm.xlu0 %262, %v43
  %v264 = vpop.permute.xlu0 %263
  %266 = vset.pattern.permute.xlu0 2
  %267 = vperm.xlu0 %266, %v44
  %v268 = vpop.permute.xlu0 %267
  %270 = vset.pattern.permute.xlu0 2
  %271 = vperm.xlu0 %270, %v45
  %v272 = vpop.permute.xlu0 %271
  %v274 = vadd.f32 %v234, %v244
  %v275 = vadd.f32 %v235, %v248
  %v276 = vadd.f32 %v236, %v252
  %v277 = vadd.f32 %v237, %v256
  %v278 = vadd.f32 %v238, %v260
  %v279 = vadd.f32 %v239, %v264
  %v280 = vadd.f32 %v240, %v268
  %v281 = vadd.f32 %v241, %v272
  %v282 = vmul.f32 %v274, 0.5
  %v283 = vmul.f32 %v275, 0.5
  %v284 = vmul.f32 %v276, 0.5
  %v285 = vmul.f32 %v277, 0.5
  %v286 = vmul.f32 %v278, 0.5
  %v287 = vmul.f32 %v279, 0.5
  %v288 = vmul.f32 %v280, 0.5
  %v289 = vmul.f32 %v281, 0.5
  %v290 = vmul.f32 %v274, %v274
  %v291 = vmul.f32 %v275, %v275
  %v292 = vmul.f32 %v276, %v276
  %v293 = vmul.f32 %v277, %v277
  %v294 = vmul.f32 %v278, %v278
  %v295 = vmul.f32 %v279, %v279
  %v296 = vmul.f32 %v280, %v280
  %v297 = vmul.f32 %v281, %v281
  %v298 = vmul.f32 %v290, %v274
  %v299 = vmul.f32 %v291, %v275
  %v300 = vmul.f32 %v292, %v276
  %v301 = vmul.f32 %v293, %v277
  %v302 = vmul.f32 %v294, %v278
  %v303 = vmul.f32 %v295, %v279
  %v304 = vmul.f32 %v296, %v280
  %v305 = vmul.f32 %v297, %v281
  %v306 = vmul.f32 %v298, 0.044715
  %v307 = vmul.f32 %v299, 0.044715
  %v308 = vmul.f32 %v300, 0.044715
  %v309 = vmul.f32 %v301, 0.044715
  %v310 = vmul.f32 %v302, 0.044715
  %v311 = vmul.f32 %v303, 0.044715
  %v312 = vmul.f32 %v304, 0.044715
  %v313 = vmul.f32 %v305, 0.044715
  %v314 = vadd.f32 %v274, %v306
  %v315 = vadd.f32 %v275, %v307
  %v316 = vadd.f32 %v276, %v308
  %v317 = vadd.f32 %v277, %v309
  %v318 = vadd.f32 %v278, %v310
  %v319 = vadd.f32 %v279, %v311
  %v320 = vadd.f32 %v280, %v312
  %v321 = vadd.f32 %v281, %v313
  %v322 = vmul.f32 %v314, 0.7978846
  %v323 = vmul.f32 %v315, 0.7978846
  %v324 = vmul.f32 %v316, 0.7978846
  %v325 = vmul.f32 %v317, 0.7978846
  %v326 = vmul.f32 %v318, 0.7978846
  %v327 = vmul.f32 %v319, 0.7978846
  %v328 = vmul.f32 %v320, 0.7978846
  %v329 = vmul.f32 %v321, 0.7978846
  %v330 = vtanh.pop %v322
  %v331 = vtanh.pop %v323
  %v332 = vtanh.pop %v324
  %v333 = vtanh.pop %v325
  %v334 = vtanh.pop %v326
  %v335 = vtanh.pop %v327
  %v336 = vtanh.pop %v328
  %v337 = vtanh.pop %v329
  %v338 = vadd.f32 %v330, 1.0
  %v339 = vadd.f32 %v331, 1.0
  %v340 = vadd.f32 %v332, 1.0
  %v341 = vadd.f32 %v333, 1.0
  %v342 = vadd.f32 %v334, 1.0
  %v343 = vadd.f32 %v335, 1.0
  %v344 = vadd.f32 %v336, 1.0
  %v345 = vadd.f32 %v337, 1.0
  %v346 = vmul.f32 %v282, %v338
  %v347 = vmul.f32 %v283, %v339
  %v348 = vmul.f32 %v284, %v340
  %v349 = vmul.f32 %v285, %v341
  %v350 = vmul.f32 %v286, %v342
  %v351 = vmul.f32 %v287, %v343
  %v352 = vmul.f32 %v288, %v344
  %v353 = vmul.f32 %v289, %v345
  %v354 = vld [vmem:[%s3] sm:$0xff]
  %v355 = vld [vmem:[%s3 + $0x8] sm:$0xff]
  %v356 = vld [vmem:[%s3 + $0x10] sm:$0xff]
  %v357 = vld [vmem:[%s3 + $0x18] sm:$0xff]
  %v358 = vld [vmem:[%s3 + $0x20] sm:$0xff]
  %v359 = vld [vmem:[%s3 + $0x28] sm:$0xff]
  %v360 = vld [vmem:[%s4] sm:$0xff]
  %v361 = vld [vmem:[%s4 + $0x8] sm:$0xff]
  %v362 = vld [vmem:[%s4 + $0x10] sm:$0xff]
  %v363 = vld [vmem:[%s4 + $0x18] sm:$0xff]
  %v364 = vld [vmem:[%s4 + $0x20] sm:$0xff]
  %v365 = vld [vmem:[%s4 + $0x28] sm:$0xff]
  %367 = vset.pattern.permute.xlu0 0
  %368 = vperm.xlu0 %367, %v360
  %v369 = vpop.permute.xlu0 %368
  %372 = vset.pattern.permute.xlu0 0
  %373 = vperm.xlu0 %372, %v361
  %v374 = vpop.permute.xlu0 %373
  %377 = vset.pattern.permute.xlu0 0
  %378 = vperm.xlu0 %377, %v362
  %v379 = vpop.permute.xlu0 %378
  %382 = vset.pattern.permute.xlu0 0
  %383 = vperm.xlu0 %382, %v363
  %v384 = vpop.permute.xlu0 %383
  %387 = vset.pattern.permute.xlu0 0
  %388 = vperm.xlu0 %387, %v364
  %v389 = vpop.permute.xlu0 %388
  %392 = vset.pattern.permute.xlu0 0
  %393 = vperm.xlu0 %392, %v365
  %v394 = vpop.permute.xlu0 %393
  %vm396 = vcmask 523264
  %v398 = vsel %vm396, %v354, 0
  %v401 = vsel %vm396, %v355, 0
  %v404 = vsel %vm396, %v356, 0
  %v407 = vsel %vm396, %v357, 0
  %v410 = vsel %vm396, %v358, 0
  %v413 = vsel %vm396, %v359, 0
  %415 = vmatpush.msra.mxu0 0.0
  %416 = vmatpush.msra.mxu0 0.0
  %417 = vmatpush.msra.mxu0 0.0
  %418 = vmatpush.msra.mxu0 0.0
  %419 = vmatpush.msra.mxu0 0.0
  %420 = vmatpush.msra.mxu0 0.0
  %421 = vmatpush.msra.mxu0 0.0
  %422 = vmatpush.msra.mxu0 0.0
  %423 = vmatpush.msra.mxu0 %v353
  %424 = vmatpush.msra.mxu0 %v352
  %425 = vmatpush.msra.mxu0 %v351
  %426 = vmatpush.msra.mxu0 %v350
  %427 = vmatpush.msra.mxu0 %v349
  %428 = vmatpush.msra.mxu0 %v348
  %429 = vmatpush.msra.mxu0 %v347
  %430 = vmatpush.msra.mxu0 %v346
  %431 = vmatmul.f32.gmra.mxu0 %v398
  %v432 = vpop.f32.mrf.mxu0
  %v433 = vadd.f32 %v369, %v432
  %434 = vmatmul.f32.gmra.mxu0 %v401
  %v435 = vpop.f32.mrf.mxu0
  %v436 = vadd.f32 %v374, %v435
  %437 = vmatmul.f32.gmra.mxu0 %v404
  %v438 = vpop.f32.mrf.mxu0
  %v439 = vadd.f32 %v379, %v438
  %440 = vmatmul.f32.gmra.mxu0 %v407
  %v441 = vpop.f32.mrf.mxu0
  %v442 = vadd.f32 %v384, %v441
  %443 = vmatmul.f32.gmra.mxu0 %v410
  %v444 = vpop.f32.mrf.mxu0
  %v445 = vadd.f32 %v389, %v444
  %446 = vmatmul.f32.gmra.mxu0 %v413
  %v447 = vpop.f32.mrf.mxu0
  %v448 = vadd.f32 %v394, %v447
  %449 = vdwg.mxu0
  %v450 = vmul.f32 %v433, %v433
  %v451 = vmul.f32 %v436, %v436
  %v452 = vmul.f32 %v439, %v439
  %v453 = vmul.f32 %v442, %v442
  %v454 = vmul.f32 %v445, %v445
  %v455 = vmul.f32 %v448, %v448
  %v456 = vsel %vm160, %v450, 0.0
  %v457 = vsel %vm160, %v451, 0.0
  %v458 = vadd.f32 %v456, %v457
  %v459 = vsel %vm160, %v452, 0.0
  %v460 = vadd.f32 %v458, %v459
  %v461 = vsel %vm160, %v453, 0.0
  %v462 = vadd.f32 %v460, %v461
  %v463 = vsel %vm160, %v454, 0.0
  %v464 = vadd.f32 %v462, %v463
  %v465 = vsel %vm160, %v455, 0.0
  %v466 = vadd.f32 %v464, %v465
  %v467 = vrot.slane %v466, 4
  %v468 = vadd.f32 %v466, %v467
  %v469 = vrot.slane %v468, 2
  %v470 = vadd.f32 %v468, %v469
  %v471 = vrot.slane %v470, 1
  %v472 = vadd.f32 %v470, %v471
  %v473 = vmul.f32 %v472, 0.020833334
  %v474 = vadd.f32 %v473, 1e-05
  %v475 = vrsqrt.pop %v474
  %v476 = vmul.f32 %v475, %v474
  %v477 = vmul.f32 %v476, %v475
  %v478 = vmul.f32 0.5, %v477
  %v479 = vsub.f32 1.5, %v478
  %v480 = vmul.f32 %v475, %v479
  %vm481 = vweird.f32 %v474
  %vm482 = vweird.f32 %v475
  %vm483 = vmor %vm481, %vm482
  %v484 = vsel %vm483, %v475, %v480
  %v485 = vmul.f32 %v433, %v484
  %v486 = vmul.f32 %v436, %v484
  %v487 = vmul.f32 %v439, %v484
  %v488 = vmul.f32 %v442, %v484
  %v489 = vmul.f32 %v445, %v484
  %v490 = vmul.f32 %v448, %v484
  %491 = vset.pattern.permute.xlu0 1
  %492 = vperm.xlu0 %491, %v360
  %v493 = vpop.permute.xlu0 %492
  %495 = vset.pattern.permute.xlu0 1
  %496 = vperm.xlu0 %495, %v361
  %v497 = vpop.permute.xlu0 %496
  %499 = vset.pattern.permute.xlu0 1
  %500 = vperm.xlu0 %499, %v362
  %v501 = vpop.permute.xlu0 %500
  %503 = vset.pattern.permute.xlu0 1
  %504 = vperm.xlu0 %503, %v363
  %v505 = vpop.permute.xlu0 %504
  %507 = vset.pattern.permute.xlu0 1
  %508 = vperm.xlu0 %507, %v364
  %v509 = vpop.permute.xlu0 %508
  %511 = vset.pattern.permute.xlu0 1
  %512 = vperm.xlu0 %511, %v365
  %v513 = vpop.permute.xlu0 %512
  %v515 = vmul.f32 %v485, %v493
  %v516 = vmul.f32 %v486, %v497
  %v517 = vmul.f32 %v487, %v501
  %v518 = vmul.f32 %v488, %v505
  %v519 = vmul.f32 %v489, %v509
  %v520 = vmul.f32 %v490, %v513
  %521 = vset.pattern.permute.xlu0 2
  %522 = vperm.xlu0 %521, %v360
  %v523 = vpop.permute.xlu0 %522
  %525 = vset.pattern.permute.xlu0 2
  %526 = vperm.xlu0 %525, %v361
  %v527 = vpop.permute.xlu0 %526
  %529 = vset.pattern.permute.xlu0 2
  %530 = vperm.xlu0 %529, %v362
  %v531 = vpop.permute.xlu0 %530
  %533 = vset.pattern.permute.xlu0 2
  %534 = vperm.xlu0 %533, %v363
  %v535 = vpop.permute.xlu0 %534
  %537 = vset.pattern.permute.xlu0 2
  %538 = vperm.xlu0 %537, %v364
  %v539 = vpop.permute.xlu0 %538
  %541 = vset.pattern.permute.xlu0 2
  %542 = vperm.xlu0 %541, %v365
  %v543 = vpop.permute.xlu0 %542
  %v545 = vadd.f32 %v515, %v523
  %v546 = vadd.f32 %v516, %v527
  %v547 = vadd.f32 %v517, %v531
  %v548 = vadd.f32 %v518, %v535
  %v549 = vadd.f32 %v519, %v539
  %v550 = vadd.f32 %v520, %v543
  %v551 = vmul.f32 %v545, 0.5
  %v552 = vmul.f32 %v546, 0.5
  %v553 = vmul.f32 %v547, 0.5
  %v554 = vmul.f32 %v548, 0.5
  %v555 = vmul.f32 %v549, 0.5
  %v556 = vmul.f32 %v550, 0.5
  %v557 = vmul.f32 %v545, %v545
  %v558 = vmul.f32 %v546, %v546
  %v559 = vmul.f32 %v547, %v547
  %v560 = vmul.f32 %v548, %v548
  %v561 = vmul.f32 %v549, %v549
  %v562 = vmul.f32 %v550, %v550
  %v563 = vmul.f32 %v557, %v545
  %v564 = vmul.f32 %v558, %v546
  %v565 = vmul.f32 %v559, %v547
  %v566 = vmul.f32 %v560, %v548
  %v567 = vmul.f32 %v561, %v549
  %v568 = vmul.f32 %v562, %v550
  %v569 = vmul.f32 %v563, 0.044715
  %v570 = vmul.f32 %v564, 0.044715
  %v571 = vmul.f32 %v565, 0.044715
  %v572 = vmul.f32 %v566, 0.044715
  %v573 = vmul.f32 %v567, 0.044715
  %v574 = vmul.f32 %v568, 0.044715
  %v575 = vadd.f32 %v545, %v569
  %v576 = vadd.f32 %v546, %v570
  %v577 = vadd.f32 %v547, %v571
  %v578 = vadd.f32 %v548, %v572
  %v579 = vadd.f32 %v549, %v573
  %v580 = vadd.f32 %v550, %v574
  %v581 = vmul.f32 %v575, 0.7978846
  %v582 = vmul.f32 %v576, 0.7978846
  %v583 = vmul.f32 %v577, 0.7978846
  %v584 = vmul.f32 %v578, 0.7978846
  %v585 = vmul.f32 %v579, 0.7978846
  %v586 = vmul.f32 %v580, 0.7978846
  %v587 = vtanh.pop %v581
  %v588 = vtanh.pop %v582
  %v589 = vtanh.pop %v583
  %v590 = vtanh.pop %v584
  %v591 = vtanh.pop %v585
  %v592 = vtanh.pop %v586
  %v593 = vadd.f32 %v587, 1.0
  %v594 = vadd.f32 %v588, 1.0
  %v595 = vadd.f32 %v589, 1.0
  %v596 = vadd.f32 %v590, 1.0
  %v597 = vadd.f32 %v591, 1.0
  %v598 = vadd.f32 %v592, 1.0
  %v599 = vmul.f32 %v551, %v593
  %v600 = vmul.f32 %v552, %v594
  %v601 = vmul.f32 %v553, %v595
  %v602 = vmul.f32 %v554, %v596
  %v603 = vmul.f32 %v555, %v597
  %v604 = vmul.f32 %v556, %v598
  %v605 = vld [vmem:[%s5] sm:$0xff]
  %v606 = vld [vmem:[%s5 + $0x8] sm:$0xff]
  %v607 = vld [vmem:[%s5 + $0x10] sm:$0xff]
  %v608 = vld [vmem:[%s5 + $0x18] sm:$0xff]
  %v609 = vld [vmem:[%s6] sm:$0xff]
  %v610 = vld [vmem:[%s6 + $0x8] sm:$0xff]
  %v611 = vld [vmem:[%s6 + $0x10] sm:$0xff]
  %v612 = vld [vmem:[%s6 + $0x18] sm:$0xff]
  %614 = vset.pattern.permute.xlu0 0
  %615 = vperm.xlu0 %614, %v609
  %v616 = vpop.permute.xlu0 %615
  %619 = vset.pattern.permute.xlu0 0
  %620 = vperm.xlu0 %619, %v610
  %v621 = vpop.permute.xlu0 %620
  %624 = vset.pattern.permute.xlu0 0
  %625 = vperm.xlu0 %624, %v611
  %v626 = vpop.permute.xlu0 %625
  %629 = vset.pattern.permute.xlu0 0
  %630 = vperm.xlu0 %629, %v612
  %v631 = vpop.permute.xlu0 %630
  %vm633 = vcmask 392192
  %v635 = vsel %vm633, %v605, 0
  %v638 = vsel %vm633, %v606, 0
  %v641 = vsel %vm633, %v607, 0
  %v644 = vsel %vm633, %v608, 0
  %646 = vmatpush.msra.mxu0 0.0
  %647 = vmatpush.msra.mxu0 0.0
  %648 = vmatpush.msra.mxu0 0.0
  %649 = vmatpush.msra.mxu0 0.0
  %650 = vmatpush.msra.mxu0 0.0
  %651 = vmatpush.msra.mxu0 0.0
  %652 = vmatpush.msra.mxu0 0.0
  %653 = vmatpush.msra.mxu0 0.0
  %654 = vmatpush.msra.mxu0 0.0
  %655 = vmatpush.msra.mxu0 0.0
  %656 = vmatpush.msra.mxu0 %v604
  %657 = vmatpush.msra.mxu0 %v603
  %658 = vmatpush.msra.mxu0 %v602
  %659 = vmatpush.msra.mxu0 %v601
  %660 = vmatpush.msra.mxu0 %v600
  %661 = vmatpush.msra.mxu0 %v599
  %662 = vmatmul.f32.gmra.mxu0 %v635
  %v663 = vpop.f32.mrf.mxu0
  %v664 = vadd.f32 %v616, %v663
  %665 = vmatmul.f32.gmra.mxu0 %v638
  %v666 = vpop.f32.mrf.mxu0
  %v667 = vadd.f32 %v621, %v666
  %668 = vmatmul.f32.gmra.mxu0 %v641
  %v669 = vpop.f32.mrf.mxu0
  %v670 = vadd.f32 %v626, %v669
  %671 = vmatmul.f32.gmra.mxu0 %v644
  %v672 = vpop.f32.mrf.mxu0
  %v673 = vadd.f32 %v631, %v672
  %674 = vdwg.mxu0
  %v675 = vmul.f32 %v664, %v664
  %v676 = vmul.f32 %v667, %v667
  %v677 = vmul.f32 %v670, %v670
  %v678 = vmul.f32 %v673, %v673
  %v679 = vsel %vm160, %v675, 0.0
  %v680 = vsel %vm160, %v676, 0.0
  %v681 = vadd.f32 %v679, %v680
  %v682 = vsel %vm160, %v677, 0.0
  %v683 = vadd.f32 %v681, %v682
  %v684 = vsel %vm160, %v678, 0.0
  %v685 = vadd.f32 %v683, %v684
  %v686 = vrot.slane %v685, 4
  %v687 = vadd.f32 %v685, %v686
  %v688 = vrot.slane %v687, 2
  %v689 = vadd.f32 %v687, %v688
  %v690 = vrot.slane %v689, 1
  %v691 = vadd.f32 %v689, %v690
  %v692 = vmul.f32 %v691, 0.03125
  %v693 = vadd.f32 %v692, 1e-05
  %v694 = vrsqrt.pop %v693
  %v695 = vmul.f32 %v694, %v693
  %v696 = vmul.f32 %v695, %v694
  %v697 = vmul.f32 0.5, %v696
  %v698 = vsub.f32 1.5, %v697
  %v699 = vmul.f32 %v694, %v698
  %vm700 = vweird.f32 %v693
  %vm701 = vweird.f32 %v694
  %vm702 = vmor %vm700, %vm701
  %v703 = vsel %vm702, %v694, %v699
  %v704 = vmul.f32 %v664, %v703
  %v705 = vmul.f32 %v667, %v703
  %v706 = vmul.f32 %v670, %v703
  %v707 = vmul.f32 %v673, %v703
  %708 = vset.pattern.permute.xlu0 1
  %709 = vperm.xlu0 %708, %v609
  %v710 = vpop.permute.xlu0 %709
  %712 = vset.pattern.permute.xlu0 1
  %713 = vperm.xlu0 %712, %v610
  %v714 = vpop.permute.xlu0 %713
  %716 = vset.pattern.permute.xlu0 1
  %717 = vperm.xlu0 %716, %v611
  %v718 = vpop.permute.xlu0 %717
  %720 = vset.pattern.permute.xlu0 1
  %721 = vperm.xlu0 %720, %v612
  %v722 = vpop.permute.xlu0 %721
  %v724 = vmul.f32 %v704, %v710
  %v725 = vmul.f32 %v705, %v714
  %v726 = vmul.f32 %v706, %v718
  %v727 = vmul.f32 %v707, %v722
  %728 = vset.pattern.permute.xlu0 2
  %729 = vperm.xlu0 %728, %v609
  %v730 = vpop.permute.xlu0 %729
  %732 = vset.pattern.permute.xlu0 2
  %733 = vperm.xlu0 %732, %v610
  %v734 = vpop.permute.xlu0 %733
  %736 = vset.pattern.permute.xlu0 2
  %737 = vperm.xlu0 %736, %v611
  %v738 = vpop.permute.xlu0 %737
  %740 = vset.pattern.permute.xlu0 2
  %741 = vperm.xlu0 %740, %v612
  %v742 = vpop.permute.xlu0 %741
  %v744 = vadd.f32 %v724, %v730
  %v745 = vadd.f32 %v725, %v734
  %v746 = vadd.f32 %v726, %v738
  %v747 = vadd.f32 %v727, %v742
  %v748 = vadd.f32 %v744, %v26
  %v749 = vadd.f32 %v745, %v27
  %v750 = vadd.f32 %v746, %v28
  %v751 = vadd.f32 %v747, %v29
  %752 = vst.msk [vmem:[%s7] sm:$0xff] %vm160, %v748
  %753 = vst.msk [vmem:[%s7 + $0x8] sm:$0xff] %vm160, %v749
  %754 = vst.msk [vmem:[%s7 + $0x10] sm:$0xff] %vm160, %v750
  %755 = vst.msk [vmem:[%s7 + $0x18] sm:$0xff] %vm160, %v751
  // Predicated region
  $region30: #{tpu_custom_call.1} parent=0 // pred_check
    _
  $region31: #{tpu_custom_call.1} parent=0 // pred_check_branch
    %757 = sbr.rel (0) target = $region33
  $region32: #{tpu_custom_call.1} parent=0 // pred_region
    _
  $region33: #{tpu_custom_call.1} parent=0 // pred_fallthru
    _
  // Predicated region
  $region34: #{tpu_custom_call.1} parent=0 // pred_check
    _
  $region35: #{tpu_custom_call.1} parent=0 // pred_check_branch
    %759 = sbr.rel (0) target = $region37
  $region36: #{tpu_custom_call.1} parent=0 // pred_region
    _
  $region37: #{tpu_custom_call.1} parent=0 // pred_fallthru
    _

</llo_original>
